<compile_context>
chip_gen: v5e
topology: v5e:2x2
jax: 0.10.0
libtpu: 0.0.40
codegen_flags: <defaults>
</compile_context>

<pallas_src>
import functools

import numpy as np

import jax
import jax.numpy as jnp
from jax import lax
from jax.experimental import pallas as pl
from jax.experimental.pallas import tpu as pltpu


# ----------------------------------------------------------------------------
# Fused kernel: LSTM1 -> LSTM2 -> FC head, single invocation, no grid.
# ----------------------------------------------------------------------------
def _fused_lstm_kernel(T, Bp, H1, H2,
                       xflat_ref, wih1T_ref, b1_ref, whh1T_ref,
                       wih2T_ref, whh2T_ref, b2_ref,
                       fc1wT_ref, fc1b_ref, fc2wT_ref, fc2b_ref,
                       out_ref, xproj_sc):
    G2 = 4 * H2

    # One-shot layer-1 input projection for all T steps (bf16 MXU operands,
    # f32 accumulation), cached in VMEM scratch.
    xproj_sc[...] = (
        jnp.dot(xflat_ref[...], wih1T_ref[...],
                preferred_element_type=jnp.float32)
        + b1_ref[...]
    )

    # ---- loop-invariant constants (hoisted out of the recurrence) ----------
    b2_full = jnp.broadcast_to(b2_ref[...], (Bp, G2))

    # sigmoid(x) = 0.5*tanh(0.5*x) + 0.5  -> one EUP tanh over the whole gate
    # block.  Per-lane scale/offset vectors distinguish sigmoid lanes (i,f,o)
    # from the candidate (g) lanes; PyTorch gate order is [i, f, g, o].
    def _gate_consts(H):
        lane = lax.broadcasted_iota(jnp.int32, (1, 4 * H), 1)
        is_cand = (lane >= 2 * H) & (lane < 3 * H)
        scale = jnp.where(is_cand, 1.0, 0.5).astype(jnp.float32)
        offset = jnp.where(is_cand, 0.0, 0.5).astype(jnp.float32)
        return scale, offset

    scale1, off1 = _gate_consts(H1)
    scale2, off2 = _gate_consts(H2)

    def _activate(g, scale, offset):
        # sigmoid lanes: 0.5*tanh(0.5*x)+0.5 ; candidate lanes: tanh(x)
        return jnp.tanh(g * scale) * scale + offset

    z1 = jnp.zeros((Bp, H1), jnp.float32)
    z2 = jnp.zeros((Bp, H2), jnp.float32)

    def step(t, carry):
        h1, c1, h2, c2 = carry

        start = t * Bp
        if not isinstance(start, (int, np.integer)):
            start = pl.multiple_of(start, 8)     # sublane-aligned slice hint

        # ---------------- layer 1 (input projection precomputed) ------------
        g1 = xproj_sc[pl.ds(start, Bp), :] + jnp.dot(
            h1.astype(jnp.bfloat16), whh1T_ref[...],
            preferred_element_type=jnp.float32)
        a1 = _activate(g1, scale1, off1)
        i1, f1 = a1[:, 0:H1], a1[:, H1:2 * H1]
        gg1, o1 = a1[:, 2 * H1:3 * H1], a1[:, 3 * H1:4 * H1]
        c1 = f1 * c1 + i1 * gg1
        h1 = o1 * jnp.tanh(c1)

        # ---------------- layer 2 (fed directly from h1, native widths) -----
        # TODO(synk): single fused (Bp,96)x(96,128) dot via lane concat of
        # [h1|h2]; identical weight bytes, saves one MXU issue/pop per step.
        g2 = (jnp.dot(h1.astype(jnp.bfloat16), wih2T_ref[...],
                      preferred_element_type=jnp.float32)
              + jnp.dot(h2.astype(jnp.bfloat16), whh2T_ref[...],
                        preferred_element_type=jnp.float32)
              + b2_full)
        a2 = _activate(g2, scale2, off2)
        i2, f2 = a2[:, 0:H2], a2[:, H2:2 * H2]
        gg2, o2 = a2[:, 2 * H2:3 * H2], a2[:, 3 * H2:4 * H2]
        c2 = f2 * c2 + i2 * gg2
        h2 = o2 * jnp.tanh(c2)
        return h1, c1, h2, c2

    # Full unroll only for short sequences; capped otherwise (keeps LLO
    # scheduling visibility without blowing up imem / vreg live ranges).
    unroll = T if T <= 16 else 8
    _, _, h2, _ = lax.fori_loop(0, T, step, (z1, z1, z2, z2), unroll=unroll)

    # ---------------- FC head on the last timestep (epilogue) ---------------
    # dropout2 on the last hidden state is identity in eval mode.  One-shot
    # (Bp,32)x(32,16)x(16,1) chain off the recurrent critical path -> f32.
    hfc = jnp.maximum(
        jnp.dot(h2, fc1wT_ref[...], preferred_element_type=jnp.float32)
        + fc1b_ref[...], 0.0)
    y = jnp.dot(hfc, fc2wT_ref[...],
                preferred_element_type=jnp.float32) + fc2b_ref[...]
    out_ref[...] = y.astype(out_ref.dtype)


# ----------------------------------------------------------------------------
# Full model forward
# ----------------------------------------------------------------------------
def lstm_model_forward(x_btf, params, h1=64, h2=32, fc=16, out=1):
    # x_btf: (B, T, input_size), batch_first like PyTorch.
    B, T, F = x_btf.shape
    Bp = max(8, ((B + 7) // 8) * 8)              # pad batch to sublane multiple

    # time-major, batch-padded, flattened for the one-shot input projection
    x_tbf = jnp.transpose(x_btf, (1, 0, 2)).astype(jnp.float32)      # (T,B,F)
    x_pad = jnp.zeros((T, Bp, F), jnp.float32).at[:, :B, :].set(x_tbf)
    x_flat = x_pad.reshape(T * Bp, F).astype(jnp.bfloat16)

    # Native (unpadded) gate widths; matmul operands bf16, biases f32.
    inputs = (
        x_flat,
        params["wih1T"].astype(jnp.bfloat16),                   # (F,  4*h1)
        params["b1"].reshape(1, 4 * h1).astype(jnp.float32),    # (1,  4*h1)
        params["whh1T"].astype(jnp.bfloat16),                   # (h1, 4*h1)
        params["wih2T"].astype(jnp.bfloat16),                   # (h1, 4*h2)
        params["whh2T"].astype(jnp.bfloat16),                   # (h2, 4*h2)
        params["b2"].reshape(1, 4 * h2).astype(jnp.float32),    # (1,  4*h2)
        params["fc1wT"].astype(jnp.float32),                    # (h2, fc)
        params["fc1b"].reshape(1, fc).astype(jnp.float32),
        params["fc2wT"].astype(jnp.float32),                    # (fc, out)
        params["fc2b"].reshape(1, out).astype(jnp.float32),
    )

    # Explicit VMEM budget from the real buffer sizes (2x for tile padding /
    # compiler temporaries + headroom, capped for v7x's 64 MiB VMEM).
    scratch_bytes = T * Bp * 4 * h1 * 4
    out_bytes = Bp * out * 4
    io_bytes = sum(int(a.size) * a.dtype.itemsize for a in inputs)
    vmem_bytes = min(2 * (io_bytes + scratch_bytes + out_bytes) + (16 << 20),
                     64 << 20)

    vmem = pl.BlockSpec(memory_space=pltpu.MemorySpace.VMEM)
    kernel = functools.partial(_fused_lstm_kernel, T, Bp, h1, h2)

    y_pad = pl.pallas_call(
        kernel,
        out_shape=jax.ShapeDtypeStruct((Bp, out), jnp.float32),
        in_specs=[vmem] * len(inputs),
        out_specs=vmem,
        scratch_shapes=[pltpu.VMEM((T * Bp, 4 * h1), jnp.float32)],
        compiler_params=pltpu.CompilerParams(vmem_limit_bytes=vmem_bytes),
    )(*inputs)
    return y_pad[:B]


# ----------------------------------------------------------------------------
# Deterministic parameter init (PyTorch-style uniform(-1/sqrt(H), 1/sqrt(H)))
# ----------------------------------------------------------------------------
def init_params(key, input_size, h1=64, h2=32, fc=16, out=1):
    keys = jax.random.split(key, 12)

    def u(k, shape, bound):
        return jax.random.uniform(k, shape, jnp.float32, -bound, bound)

    s1 = 1.0 / jnp.sqrt(h1)
    s2 = 1.0 / jnp.sqrt(h2)
    sfc1 = 1.0 / jnp.sqrt(h2)
    sfc2 = 1.0 / jnp.sqrt(fc)

    return {
        # lstm1 (pre-transposed: W_ih^T (F,4h), W_hh^T (h,4h); gate order ifgo)
        "wih1T": u(keys[0], (input_size, 4 * h1), s1),
        "whh1T": u(keys[1], (h1, 4 * h1), s1),
        # PyTorch has b_ih + b_hh; fold their sum into a single bias
        "b1": u(keys[2], (4 * h1,), s1) + u(keys[3], (4 * h1,), s1),
        # lstm2
        "wih2T": u(keys[4], (h1, 4 * h2), s2),
        "whh2T": u(keys[5], (h2, 4 * h2), s2),
        "b2": u(keys[6], (4 * h2,), s2) + u(keys[7], (4 * h2,), s2),
        # fc head
        "fc1wT": u(keys[8], (h2, fc), sfc1),
        "fc1b": u(keys[9], (fc,), sfc1),
        "fc2wT": u(keys[10], (fc, out), sfc2),
        "fc2b": u(keys[11], (out,), sfc2),
    }


# ----------------------------------------------------------------------------
# Pure-JAX f32 reference for correctness checking
# ----------------------------------------------------------------------------
def _ref_lstm(x_btf, wihT, whhT, b, H):
    B, T, _ = x_btf.shape
    h = jnp.zeros((B, H), jnp.float32)
    c = jnp.zeros((B, H), jnp.float32)
    outs = []
    for t in range(T):
        g = x_btf[:, t, :] @ wihT + h @ whhT + b
        i = jax.nn.sigmoid(g[:, 0 * H:1 * H])
        f = jax.nn.sigmoid(g[:, 1 * H:2 * H])
        gg = jnp.tanh(g[:, 2 * H:3 * H])
        o = jax.nn.sigmoid(g[:, 3 * H:4 * H])
        c = f * c + i * gg
        h = o * jnp.tanh(c)
        outs.append(h)
    return jnp.stack(outs, axis=1)


def _ref_forward(x_btf, p, h1=64, h2=32):
    y1 = _ref_lstm(x_btf, p["wih1T"], p["whh1T"], p["b1"], h1)
    y2 = _ref_lstm(y1, p["wih2T"], p["whh2T"], p["b2"], h2)
    last = y2[:, -1, :]
    h = jnp.maximum(last @ p["fc1wT"] + p["fc1b"], 0.0)
    return h @ p["fc2wT"] + p["fc2b"]


if __name__ == "__main__":
    B, T, F = 2, 8, 8          # batch, seq_len, input_size
    key = jax.random.PRNGKey(0)
    kx, kp = jax.random.split(key)

    x = jax.random.normal(kx, (B, T, F), jnp.float32)
    params = init_params(kp, input_size=F)

    fwd = jax.jit(lstm_model_forward)
    out = jax.block_until_ready(fwd(x, params))

    ref = _ref_forward(x, params)
    assert out.shape == (B, 1)
    # bf16 MXU operands inside the kernel vs. f32 reference -> slightly looser
    # tolerance than the pure-f32 version (state & activations stay f32).
    assert jnp.allclose(out, ref, rtol=2e-2, atol=2e-2), (out, ref)

    print("KERNEL_OK")
</pallas_src>

<mosaic_0001>
module attributes {stable_mosaic.version = 11 : i64} {
  func.func @_fused_lstm_kernel(%arg0: memref<64x8xbf16, #tpu.memory_space<vmem>>, %arg1: memref<8x256xbf16, #tpu.memory_space<vmem>>, %arg2: memref<1x256xf32, #tpu.memory_space<vmem>>, %arg3: memref<64x256xbf16, #tpu.memory_space<vmem>>, %arg4: memref<64x128xbf16, #tpu.memory_space<vmem>>, %arg5: memref<32x128xbf16, #tpu.memory_space<vmem>>, %arg6: memref<1x128xf32, #tpu.memory_space<vmem>>, %arg7: memref<32x16xf32, #tpu.memory_space<vmem>>, %arg8: memref<1x16xf32, #tpu.memory_space<vmem>>, %arg9: memref<16x1xf32, #tpu.memory_space<vmem>>, %arg10: memref<1x1xf32, #tpu.memory_space<vmem>>, %arg11: memref<8x1xf32, #tpu.memory_space<vmem>>, %arg12: memref<64x256xf32, #tpu.memory_space<vmem>>) attributes {dimension_semantics = [], scalar_prefetch = 0 : i64, scratch_operands = 1 : i64, tpu.core_type = #tpu.core_type<tc>} {
    %c0 = arith.constant 0 : index
    %c0_0 = arith.constant 0 : index
    %0 = vector.load %arg0[%c0, %c0_0] : memref<64x8xbf16, #tpu.memory_space<vmem>>, vector<64x8xbf16>
    %c0_1 = arith.constant 0 : index
    %c0_2 = arith.constant 0 : index
    %1 = vector.load %arg1[%c0_1, %c0_2] : memref<8x256xbf16, #tpu.memory_space<vmem>>, vector<8x256xbf16>
    %cst = arith.constant dense<0.000000e+00> : vector<64x256xf32>
    %2 = tpu.matmul %0, %1, %cst {dimension_numbers = #tpu.dot_dimension_numbers<[1], [0], [0], [1], [0, 0, 1, 1], [], []>} : vector<64x8xbf16>, vector<8x256xbf16>, vector<64x256xf32> -> vector<64x256xf32>
    %c0_3 = arith.constant 0 : index
    %c0_4 = arith.constant 0 : index
    %3 = vector.load %arg2[%c0_3, %c0_4] : memref<1x256xf32, #tpu.memory_space<vmem>>, vector<1x256xf32>
    %4 = vector.broadcast %3 : vector<1x256xf32> to vector<64x256xf32>
    %5 = arith.addf %2, %4 : vector<64x256xf32>
    %c0_5 = arith.constant 0 : index
    %c0_6 = arith.constant 0 : index
    %6 = vector.load %arg12[%c0_5, %c0_6] : memref<64x256xf32, #tpu.memory_space<vmem>>, vector<64x256xf32>
    tpu.vector_store %arg12[%c0_5, %c0_6], %5 {strides = array<i32>} : memref<64x256xf32, #tpu.memory_space<vmem>>, vector<64x256xf32>,
    %c0_7 = arith.constant 0 : index
    %c0_8 = arith.constant 0 : index
    %7 = vector.load %arg6[%c0_7, %c0_8] : memref<1x128xf32, #tpu.memory_space<vmem>>, vector<1x128xf32>
    %8 = vector.shape_cast %7 : vector<1x128xf32> to vector<1x128xf32>
    %9 = vector.broadcast %8 : vector<1x128xf32> to vector<8x128xf32>
    %10 = tpu.iota {dimensions = array<i32: 1>} : vector<1x256xi32>
    %c128_i32 = arith.constant 128 : i32
    %11 = vector.broadcast %c128_i32 : i32 to vector<1x256xi32>
    %12 = arith.cmpi sge, %10, %11 : vector<1x256xi32>
    %c192_i32 = arith.constant 192 : i32
    %13 = vector.broadcast %c192_i32 : i32 to vector<1x256xi32>
    %14 = arith.cmpi slt, %10, %13 : vector<1x256xi32>
    %15 = arith.andi %12, %14 : vector<1x256xi1>
    %cst_9 = arith.constant 1.000000e+00 : f32
    %cst_10 = arith.constant 5.000000e-01 : f32
    %16 = vector.broadcast %cst_9 : f32 to vector<1x256xf32>
    %17 = vector.broadcast %cst_10 : f32 to vector<1x256xf32>
    %18 = arith.select %15, %16, %17 : vector<1x256xi1>, vector<1x256xf32>
    %cst_11 = arith.constant 0.000000e+00 : f32
    %cst_12 = arith.constant 5.000000e-01 : f32
    %19 = vector.broadcast %cst_11 : f32 to vector<1x256xf32>
    %20 = vector.broadcast %cst_12 : f32 to vector<1x256xf32>
    %21 = arith.select %15, %19, %20 : vector<1x256xi1>, vector<1x256xf32>
    %22 = tpu.iota {dimensions = array<i32: 1>} : vector<1x128xi32>
    %c64_i32 = arith.constant 64 : i32
    %23 = vector.broadcast %c64_i32 : i32 to vector<1x128xi32>
    %24 = arith.cmpi sge, %22, %23 : vector<1x128xi32>
    %c96_i32 = arith.constant 96 : i32
    %25 = vector.broadcast %c96_i32 : i32 to vector<1x128xi32>
    %26 = arith.cmpi slt, %22, %25 : vector<1x128xi32>
    %27 = arith.andi %24, %26 : vector<1x128xi1>
    %cst_13 = arith.constant 1.000000e+00 : f32
    %cst_14 = arith.constant 5.000000e-01 : f32
    %28 = vector.broadcast %cst_13 : f32 to vector<1x128xf32>
    %29 = vector.broadcast %cst_14 : f32 to vector<1x128xf32>
    %30 = arith.select %27, %28, %29 : vector<1x128xi1>, vector<1x128xf32>
    %cst_15 = arith.constant 0.000000e+00 : f32
    %cst_16 = arith.constant 5.000000e-01 : f32
    %31 = vector.broadcast %cst_15 : f32 to vector<1x128xf32>
    %32 = vector.broadcast %cst_16 : f32 to vector<1x128xf32>
    %33 = arith.select %27, %31, %32 : vector<1x128xi1>, vector<1x128xf32>
    %cst_17 = arith.constant 0.000000e+00 : f32
    %34 = vector.broadcast %cst_17 : f32 to vector<8x64xf32>
    %cst_18 = arith.constant 0.000000e+00 : f32
    %35 = vector.broadcast %cst_18 : f32 to vector<8x32xf32>
    %c0_i32 = arith.constant 0 : i32
    %c8_i32 = arith.constant 8 : i32
    %36 = arith.muli %c0_i32, %c8_i32 : i32
    %37 = tpu.assume_multiple %36, 8 : i32
    %38 = arith.index_cast %37 : i32 to index
    %c0_19 = arith.constant 0 : index
    %39 = vector.load %arg12[%38, %c0_19] : memref<64x256xf32, #tpu.memory_space<vmem>>, vector<8x256xf32>
    %40 = arith.truncf %34 : vector<8x64xf32> to vector<8x64xbf16>
    %c0_20 = arith.constant 0 : index
    %c0_21 = arith.constant 0 : index
    %41 = vector.load %arg3[%c0_20, %c0_21] : memref<64x256xbf16, #tpu.memory_space<vmem>>, vector<64x256xbf16>
    %cst_22 = arith.constant dense<0.000000e+00> : vector<8x256xf32>
    %42 = tpu.matmul %40, %41, %cst_22 {dimension_numbers = #tpu.dot_dimension_numbers<[1], [0], [0], [1], [0, 0, 1, 1], [], []>} : vector<8x64xbf16>, vector<64x256xbf16>, vector<8x256xf32> -> vector<8x256xf32>
    %43 = arith.addf %39, %42 : vector<8x256xf32>
    %44 = vector.broadcast %18 : vector<1x256xf32> to vector<8x256xf32>
    %45 = arith.mulf %43, %44 : vector<8x256xf32>
    %46 = math.tanh %45 : vector<8x256xf32>
    %47 = vector.broadcast %18 : vector<1x256xf32> to vector<8x256xf32>
    %48 = arith.mulf %46, %47 : vector<8x256xf32>
    %49 = vector.broadcast %21 : vector<1x256xf32> to vector<8x256xf32>
    %50 = arith.addf %48, %49 : vector<8x256xf32>
    %51 = vector.extract_strided_slice %50 {offsets = [0, 0], sizes = [8, 64], strides = [1, 1]} : vector<8x256xf32> to vector<8x64xf32>
    %52 = vector.extract_strided_slice %50 {offsets = [0, 64], sizes = [8, 64], strides = [1, 1]} : vector<8x256xf32> to vector<8x64xf32>
    %53 = vector.extract_strided_slice %50 {offsets = [0, 128], sizes = [8, 64], strides = [1, 1]} : vector<8x256xf32> to vector<8x64xf32>
    %54 = vector.extract_strided_slice %50 {offsets = [0, 192], sizes = [8, 64], strides = [1, 1]} : vector<8x256xf32> to vector<8x64xf32>
    %55 = arith.mulf %52, %34 : vector<8x64xf32>
    %56 = arith.mulf %51, %53 : vector<8x64xf32>
    %57 = arith.addf %55, %56 : vector<8x64xf32>
    %58 = math.tanh %57 : vector<8x64xf32>
    %59 = arith.mulf %54, %58 : vector<8x64xf32>
    %60 = arith.truncf %59 : vector<8x64xf32> to vector<8x64xbf16>
    %c0_23 = arith.constant 0 : index
    %c0_24 = arith.constant 0 : index
    %61 = vector.load %arg4[%c0_23, %c0_24] : memref<64x128xbf16, #tpu.memory_space<vmem>>, vector<64x128xbf16>
    %cst_25 = arith.constant dense<0.000000e+00> : vector<8x128xf32>
    %62 = tpu.matmul %60, %61, %cst_25 {dimension_numbers = #tpu.dot_dimension_numbers<[1], [0], [0], [1], [0, 0, 1, 1], [], []>} : vector<8x64xbf16>, vector<64x128xbf16>, vector<8x128xf32> -> vector<8x128xf32>
    %63 = arith.truncf %35 : vector<8x32xf32> to vector<8x32xbf16>
    %c0_26 = arith.constant 0 : index
    %c0_27 = arith.constant 0 : index
    %64 = vector.load %arg5[%c0_26, %c0_27] : memref<32x128xbf16, #tpu.memory_space<vmem>>, vector<32x128xbf16>
    %cst_28 = arith.constant dense<0.000000e+00> : vector<8x128xf32>
    %65 = tpu.matmul %63, %64, %cst_28 {dimension_numbers = #tpu.dot_dimension_numbers<[1], [0], [0], [1], [0, 0, 1, 1], [], []>} : vector<8x32xbf16>, vector<32x128xbf16>, vector<8x128xf32> -> vector<8x128xf32>
    %66 = arith.addf %62, %65 : vector<8x128xf32>
    %67 = arith.addf %66, %9 : vector<8x128xf32>
    %68 = vector.broadcast %30 : vector<1x128xf32> to vector<8x128xf32>
    %69 = arith.mulf %67, %68 : vector<8x128xf32>
    %70 = math.tanh %69 : vector<8x128xf32>
    %71 = vector.broadcast %30 : vector<1x128xf32> to vector<8x128xf32>
    %72 = arith.mulf %70, %71 : vector<8x128xf32>
    %73 = vector.broadcast %33 : vector<1x128xf32> to vector<8x128xf32>
    %74 = arith.addf %72, %73 : vector<8x128xf32>
    %75 = vector.extract_strided_slice %74 {offsets = [0, 0], sizes = [8, 32], strides = [1, 1]} : vector<8x128xf32> to vector<8x32xf32>
    %76 = vector.extract_strided_slice %74 {offsets = [0, 32], sizes = [8, 32], strides = [1, 1]} : vector<8x128xf32> to vector<8x32xf32>
    %77 = vector.extract_strided_slice %74 {offsets = [0, 64], sizes = [8, 32], strides = [1, 1]} : vector<8x128xf32> to vector<8x32xf32>
    %78 = vector.extract_strided_slice %74 {offsets = [0, 96], sizes = [8, 32], strides = [1, 1]} : vector<8x128xf32> to vector<8x32xf32>
    %79 = arith.mulf %76, %35 : vector<8x32xf32>
    %80 = arith.mulf %75, %77 : vector<8x32xf32>
    %81 = arith.addf %79, %80 : vector<8x32xf32>
    %82 = math.tanh %81 : vector<8x32xf32>
    %83 = arith.mulf %78, %82 : vector<8x32xf32>
    %c1_i32 = arith.constant 1 : i32
    %c8_i32_29 = arith.constant 8 : i32
    %84 = arith.muli %c1_i32, %c8_i32_29 : i32
    %85 = tpu.assume_multiple %84, 8 : i32
    %86 = arith.index_cast %85 : i32 to index
    %c0_30 = arith.constant 0 : index
    %87 = vector.load %arg12[%86, %c0_30] : memref<64x256xf32, #tpu.memory_space<vmem>>, vector<8x256xf32>
    %88 = arith.truncf %59 : vector<8x64xf32> to vector<8x64xbf16>
    %c0_31 = arith.constant 0 : index
    %c0_32 = arith.constant 0 : index
    %89 = vector.load %arg3[%c0_31, %c0_32] : memref<64x256xbf16, #tpu.memory_space<vmem>>, vector<64x256xbf16>
    %cst_33 = arith.constant dense<0.000000e+00> : vector<8x256xf32>
    %90 = tpu.matmul %88, %89, %cst_33 {dimension_numbers = #tpu.dot_dimension_numbers<[1], [0], [0], [1], [0, 0, 1, 1], [], []>} : vector<8x64xbf16>, vector<64x256xbf16>, vector<8x256xf32> -> vector<8x256xf32>
    %91 = arith.addf %87, %90 : vector<8x256xf32>
    %92 = vector.broadcast %18 : vector<1x256xf32> to vector<8x256xf32>
    %93 = arith.mulf %91, %92 : vector<8x256xf32>
    %94 = math.tanh %93 : vector<8x256xf32>
    %95 = vector.broadcast %18 : vector<1x256xf32> to vector<8x256xf32>
    %96 = arith.mulf %94, %95 : vector<8x256xf32>
    %97 = vector.broadcast %21 : vector<1x256xf32> to vector<8x256xf32>
    %98 = arith.addf %96, %97 : vector<8x256xf32>
    %99 = vector.extract_strided_slice %98 {offsets = [0, 0], sizes = [8, 64], strides = [1, 1]} : vector<8x256xf32> to vector<8x64xf32>
    %100 = vector.extract_strided_slice %98 {offsets = [0, 64], sizes = [8, 64], strides = [1, 1]} : vector<8x256xf32> to vector<8x64xf32>
    %101 = vector.extract_strided_slice %98 {offsets = [0, 128], sizes = [8, 64], strides = [1, 1]} : vector<8x256xf32> to vector<8x64xf32>
    %102 = vector.extract_strided_slice %98 {offsets = [0, 192], sizes = [8, 64], strides = [1, 1]} : vector<8x256xf32> to vector<8x64xf32>
    %103 = arith.mulf %100, %57 : vector<8x64xf32>
    %104 = arith.mulf %99, %101 : vector<8x64xf32>
    %105 = arith.addf %103, %104 : vector<8x64xf32>
    %106 = math.tanh %105 : vector<8x64xf32>
    %107 = arith.mulf %102, %106 : vector<8x64xf32>
    %108 = arith.truncf %107 : vector<8x64xf32> to vector<8x64xbf16>
    %c0_34 = arith.constant 0 : index
    %c0_35 = arith.constant 0 : index
    %109 = vector.load %arg4[%c0_34, %c0_35] : memref<64x128xbf16, #tpu.memory_space<vmem>>, vector<64x128xbf16>
    %cst_36 = arith.constant dense<0.000000e+00> : vector<8x128xf32>
    %110 = tpu.matmul %108, %109, %cst_36 {dimension_numbers = #tpu.dot_dimension_numbers<[1], [0], [0], [1], [0, 0, 1, 1], [], []>} : vector<8x64xbf16>, vector<64x128xbf16>, vector<8x128xf32> -> vector<8x128xf32>
    %111 = arith.truncf %83 : vector<8x32xf32> to vector<8x32xbf16>
    %c0_37 = arith.constant 0 : index
    %c0_38 = arith.constant 0 : index
    %112 = vector.load %arg5[%c0_37, %c0_38] : memref<32x128xbf16, #tpu.memory_space<vmem>>, vector<32x128xbf16>
    %cst_39 = arith.constant dense<0.000000e+00> : vector<8x128xf32>
    %113 = tpu.matmul %111, %112, %cst_39 {dimension_numbers = #tpu.dot_dimension_numbers<[1], [0], [0], [1], [0, 0, 1, 1], [], []>} : vector<8x32xbf16>, vector<32x128xbf16>, vector<8x128xf32> -> vector<8x128xf32>
    %114 = arith.addf %110, %113 : vector<8x128xf32>
    %115 = arith.addf %114, %9 : vector<8x128xf32>
    %116 = vector.broadcast %30 : vector<1x128xf32> to vector<8x128xf32>
    %117 = arith.mulf %115, %116 : vector<8x128xf32>
    %118 = math.tanh %117 : vector<8x128xf32>
    %119 = vector.broadcast %30 : vector<1x128xf32> to vector<8x128xf32>
    %120 = arith.mulf %118, %119 : vector<8x128xf32>
    %121 = vector.broadcast %33 : vector<1x128xf32> to vector<8x128xf32>
    %122 = arith.addf %120, %121 : vector<8x128xf32>
    %123 = vector.extract_strided_slice %122 {offsets = [0, 0], sizes = [8, 32], strides = [1, 1]} : vector<8x128xf32> to vector<8x32xf32>
    %124 = vector.extract_strided_slice %122 {offsets = [0, 32], sizes = [8, 32], strides = [1, 1]} : vector<8x128xf32> to vector<8x32xf32>
    %125 = vector.extract_strided_slice %122 {offsets = [0, 64], sizes = [8, 32], strides = [1, 1]} : vector<8x128xf32> to vector<8x32xf32>
    %126 = vector.extract_strided_slice %122 {offsets = [0, 96], sizes = [8, 32], strides = [1, 1]} : vector<8x128xf32> to vector<8x32xf32>
    %127 = arith.mulf %124, %81 : vector<8x32xf32>
    %128 = arith.mulf %123, %125 : vector<8x32xf32>
    %129 = arith.addf %127, %128 : vector<8x32xf32>
    %130 = math.tanh %129 : vector<8x32xf32>
    %131 = arith.mulf %126, %130 : vector<8x32xf32>
    %c2_i32 = arith.constant 2 : i32
    %c8_i32_40 = arith.constant 8 : i32
    %132 = arith.muli %c2_i32, %c8_i32_40 : i32
    %133 = tpu.assume_multiple %132, 8 : i32
    %134 = arith.index_cast %133 : i32 to index
    %c0_41 = arith.constant 0 : index
    %135 = vector.load %arg12[%134, %c0_41] : memref<64x256xf32, #tpu.memory_space<vmem>>, vector<8x256xf32>
    %136 = arith.truncf %107 : vector<8x64xf32> to vector<8x64xbf16>
    %c0_42 = arith.constant 0 : index
    %c0_43 = arith.constant 0 : index
    %137 = vector.load %arg3[%c0_42, %c0_43] : memref<64x256xbf16, #tpu.memory_space<vmem>>, vector<64x256xbf16>
    %cst_44 = arith.constant dense<0.000000e+00> : vector<8x256xf32>
    %138 = tpu.matmul %136, %137, %cst_44 {dimension_numbers = #tpu.dot_dimension_numbers<[1], [0], [0], [1], [0, 0, 1, 1], [], []>} : vector<8x64xbf16>, vector<64x256xbf16>, vector<8x256xf32> -> vector<8x256xf32>
    %139 = arith.addf %135, %138 : vector<8x256xf32>
    %140 = vector.broadcast %18 : vector<1x256xf32> to vector<8x256xf32>
    %141 = arith.mulf %139, %140 : vector<8x256xf32>
    %142 = math.tanh %141 : vector<8x256xf32>
    %143 = vector.broadcast %18 : vector<1x256xf32> to vector<8x256xf32>
    %144 = arith.mulf %142, %143 : vector<8x256xf32>
    %145 = vector.broadcast %21 : vector<1x256xf32> to vector<8x256xf32>
    %146 = arith.addf %144, %145 : vector<8x256xf32>
    %147 = vector.extract_strided_slice %146 {offsets = [0, 0], sizes = [8, 64], strides = [1, 1]} : vector<8x256xf32> to vector<8x64xf32>
    %148 = vector.extract_strided_slice %146 {offsets = [0, 64], sizes = [8, 64], strides = [1, 1]} : vector<8x256xf32> to vector<8x64xf32>
    %149 = vector.extract_strided_slice %146 {offsets = [0, 128], sizes = [8, 64], strides = [1, 1]} : vector<8x256xf32> to vector<8x64xf32>
    %150 = vector.extract_strided_slice %146 {offsets = [0, 192], sizes = [8, 64], strides = [1, 1]} : vector<8x256xf32> to vector<8x64xf32>
    %151 = arith.mulf %148, %105 : vector<8x64xf32>
    %152 = arith.mulf %147, %149 : vector<8x64xf32>
    %153 = arith.addf %151, %152 : vector<8x64xf32>
    %154 = math.tanh %153 : vector<8x64xf32>
    %155 = arith.mulf %150, %154 : vector<8x64xf32>
    %156 = arith.truncf %155 : vector<8x64xf32> to vector<8x64xbf16>
    %c0_45 = arith.constant 0 : index
    %c0_46 = arith.constant 0 : index
    %157 = vector.load %arg4[%c0_45, %c0_46] : memref<64x128xbf16, #tpu.memory_space<vmem>>, vector<64x128xbf16>
    %cst_47 = arith.constant dense<0.000000e+00> : vector<8x128xf32>
    %158 = tpu.matmul %156, %157, %cst_47 {dimension_numbers = #tpu.dot_dimension_numbers<[1], [0], [0], [1], [0, 0, 1, 1], [], []>} : vector<8x64xbf16>, vector<64x128xbf16>, vector<8x128xf32> -> vector<8x128xf32>
    %159 = arith.truncf %131 : vector<8x32xf32> to vector<8x32xbf16>
    %c0_48 = arith.constant 0 : index
    %c0_49 = arith.constant 0 : index
    %160 = vector.load %arg5[%c0_48, %c0_49] : memref<32x128xbf16, #tpu.memory_space<vmem>>, vector<32x128xbf16>
    %cst_50 = arith.constant dense<0.000000e+00> : vector<8x128xf32>
    %161 = tpu.matmul %159, %160, %cst_50 {dimension_numbers = #tpu.dot_dimension_numbers<[1], [0], [0], [1], [0, 0, 1, 1], [], []>} : vector<8x32xbf16>, vector<32x128xbf16>, vector<8x128xf32> -> vector<8x128xf32>
    %162 = arith.addf %158, %161 : vector<8x128xf32>
    %163 = arith.addf %162, %9 : vector<8x128xf32>
    %164 = vector.broadcast %30 : vector<1x128xf32> to vector<8x128xf32>
    %165 = arith.mulf %163, %164 : vector<8x128xf32>
    %166 = math.tanh %165 : vector<8x128xf32>
    %167 = vector.broadcast %30 : vector<1x128xf32> to vector<8x128xf32>
    %168 = arith.mulf %166, %167 : vector<8x128xf32>
    %169 = vector.broadcast %33 : vector<1x128xf32> to vector<8x128xf32>
    %170 = arith.addf %168, %169 : vector<8x128xf32>
    %171 = vector.extract_strided_slice %170 {offsets = [0, 0], sizes = [8, 32], strides = [1, 1]} : vector<8x128xf32> to vector<8x32xf32>
    %172 = vector.extract_strided_slice %170 {offsets = [0, 32], sizes = [8, 32], strides = [1, 1]} : vector<8x128xf32> to vector<8x32xf32>
    %173 = vector.extract_strided_slice %170 {offsets = [0, 64], sizes = [8, 32], strides = [1, 1]} : vector<8x128xf32> to vector<8x32xf32>
    %174 = vector.extract_strided_slice %170 {offsets = [0, 96], sizes = [8, 32], strides = [1, 1]} : vector<8x128xf32> to vector<8x32xf32>
    %175 = arith.mulf %172, %129 : vector<8x32xf32>
    %176 = arith.mulf %171, %173 : vector<8x32xf32>
    %177 = arith.addf %175, %176 : vector<8x32xf32>
    %178 = math.tanh %177 : vector<8x32xf32>
    %179 = arith.mulf %174, %178 : vector<8x32xf32>
    %c3_i32 = arith.constant 3 : i32
    %c8_i32_51 = arith.constant 8 : i32
    %180 = arith.muli %c3_i32, %c8_i32_51 : i32
    %181 = tpu.assume_multiple %180, 8 : i32
    %182 = arith.index_cast %181 : i32 to index
    %c0_52 = arith.constant 0 : index
    %183 = vector.load %arg12[%182, %c0_52] : memref<64x256xf32, #tpu.memory_space<vmem>>, vector<8x256xf32>
    %184 = arith.truncf %155 : vector<8x64xf32> to vector<8x64xbf16>
    %c0_53 = arith.constant 0 : index
    %c0_54 = arith.constant 0 : index
    %185 = vector.load %arg3[%c0_53, %c0_54] : memref<64x256xbf16, #tpu.memory_space<vmem>>, vector<64x256xbf16>
    %cst_55 = arith.constant dense<0.000000e+00> : vector<8x256xf32>
    %186 = tpu.matmul %184, %185, %cst_55 {dimension_numbers = #tpu.dot_dimension_numbers<[1], [0], [0], [1], [0, 0, 1, 1], [], []>} : vector<8x64xbf16>, vector<64x256xbf16>, vector<8x256xf32> -> vector<8x256xf32>
    %187 = arith.addf %183, %186 : vector<8x256xf32>
    %188 = vector.broadcast %18 : vector<1x256xf32> to vector<8x256xf32>
    %189 = arith.mulf %187, %188 : vector<8x256xf32>
    %190 = math.tanh %189 : vector<8x256xf32>
    %191 = vector.broadcast %18 : vector<1x256xf32> to vector<8x256xf32>
    %192 = arith.mulf %190, %191 : vector<8x256xf32>
    %193 = vector.broadcast %21 : vector<1x256xf32> to vector<8x256xf32>
    %194 = arith.addf %192, %193 : vector<8x256xf32>
    %195 = vector.extract_strided_slice %194 {offsets = [0, 0], sizes = [8, 64], strides = [1, 1]} : vector<8x256xf32> to vector<8x64xf32>
    %196 = vector.extract_strided_slice %194 {offsets = [0, 64], sizes = [8, 64], strides = [1, 1]} : vector<8x256xf32> to vector<8x64xf32>
    %197 = vector.extract_strided_slice %194 {offsets = [0, 128], sizes = [8, 64], strides = [1, 1]} : vector<8x256xf32> to vector<8x64xf32>
    %198 = vector.extract_strided_slice %194 {offsets = [0, 192], sizes = [8, 64], strides = [1, 1]} : vector<8x256xf32> to vector<8x64xf32>
    %199 = arith.mulf %196, %153 : vector<8x64xf32>
    %200 = arith.mulf %195, %197 : vector<8x64xf32>
    %201 = arith.addf %199, %200 : vector<8x64xf32>
    %202 = math.tanh %201 : vector<8x64xf32>
    %203 = arith.mulf %198, %202 : vector<8x64xf32>
    %204 = arith.truncf %203 : vector<8x64xf32> to vector<8x64xbf16>
    %c0_56 = arith.constant 0 : index
    %c0_57 = arith.constant 0 : index
    %205 = vector.load %arg4[%c0_56, %c0_57] : memref<64x128xbf16, #tpu.memory_space<vmem>>, vector<64x128xbf16>
    %cst_58 = arith.constant dense<0.000000e+00> : vector<8x128xf32>
    %206 = tpu.matmul %204, %205, %cst_58 {dimension_numbers = #tpu.dot_dimension_numbers<[1], [0], [0], [1], [0, 0, 1, 1], [], []>} : vector<8x64xbf16>, vector<64x128xbf16>, vector<8x128xf32> -> vector<8x128xf32>
    %207 = arith.truncf %179 : vector<8x32xf32> to vector<8x32xbf16>
    %c0_59 = arith.constant 0 : index
    %c0_60 = arith.constant 0 : index
    %208 = vector.load %arg5[%c0_59, %c0_60] : memref<32x128xbf16, #tpu.memory_space<vmem>>, vector<32x128xbf16>
    %cst_61 = arith.constant dense<0.000000e+00> : vector<8x128xf32>
    %209 = tpu.matmul %207, %208, %cst_61 {dimension_numbers = #tpu.dot_dimension_numbers<[1], [0], [0], [1], [0, 0, 1, 1], [], []>} : vector<8x32xbf16>, vector<32x128xbf16>, vector<8x128xf32> -> vector<8x128xf32>
    %210 = arith.addf %206, %209 : vector<8x128xf32>
    %211 = arith.addf %210, %9 : vector<8x128xf32>
    %212 = vector.broadcast %30 : vector<1x128xf32> to vector<8x128xf32>
    %213 = arith.mulf %211, %212 : vector<8x128xf32>
    %214 = math.tanh %213 : vector<8x128xf32>
    %215 = vector.broadcast %30 : vector<1x128xf32> to vector<8x128xf32>
    %216 = arith.mulf %214, %215 : vector<8x128xf32>
    %217 = vector.broadcast %33 : vector<1x128xf32> to vector<8x128xf32>
    %218 = arith.addf %216, %217 : vector<8x128xf32>
    %219 = vector.extract_strided_slice %218 {offsets = [0, 0], sizes = [8, 32], strides = [1, 1]} : vector<8x128xf32> to vector<8x32xf32>
    %220 = vector.extract_strided_slice %218 {offsets = [0, 32], sizes = [8, 32], strides = [1, 1]} : vector<8x128xf32> to vector<8x32xf32>
    %221 = vector.extract_strided_slice %218 {offsets = [0, 64], sizes = [8, 32], strides = [1, 1]} : vector<8x128xf32> to vector<8x32xf32>
    %222 = vector.extract_strided_slice %218 {offsets = [0, 96], sizes = [8, 32], strides = [1, 1]} : vector<8x128xf32> to vector<8x32xf32>
    %223 = arith.mulf %220, %177 : vector<8x32xf32>
    %224 = arith.mulf %219, %221 : vector<8x32xf32>
    %225 = arith.addf %223, %224 : vector<8x32xf32>
    %226 = math.tanh %225 : vector<8x32xf32>
    %227 = arith.mulf %222, %226 : vector<8x32xf32>
    %c4_i32 = arith.constant 4 : i32
    %c8_i32_62 = arith.constant 8 : i32
    %228 = arith.muli %c4_i32, %c8_i32_62 : i32
    %229 = tpu.assume_multiple %228, 8 : i32
    %230 = arith.index_cast %229 : i32 to index
    %c0_63 = arith.constant 0 : index
    %231 = vector.load %arg12[%230, %c0_63] : memref<64x256xf32, #tpu.memory_space<vmem>>, vector<8x256xf32>
    %232 = arith.truncf %203 : vector<8x64xf32> to vector<8x64xbf16>
    %c0_64 = arith.constant 0 : index
    %c0_65 = arith.constant 0 : index
    %233 = vector.load %arg3[%c0_64, %c0_65] : memref<64x256xbf16, #tpu.memory_space<vmem>>, vector<64x256xbf16>
    %cst_66 = arith.constant dense<0.000000e+00> : vector<8x256xf32>
    %234 = tpu.matmul %232, %233, %cst_66 {dimension_numbers = #tpu.dot_dimension_numbers<[1], [0], [0], [1], [0, 0, 1, 1], [], []>} : vector<8x64xbf16>, vector<64x256xbf16>, vector<8x256xf32> -> vector<8x256xf32>
    %235 = arith.addf %231, %234 : vector<8x256xf32>
    %236 = vector.broadcast %18 : vector<1x256xf32> to vector<8x256xf32>
    %237 = arith.mulf %235, %236 : vector<8x256xf32>
    %238 = math.tanh %237 : vector<8x256xf32>
    %239 = vector.broadcast %18 : vector<1x256xf32> to vector<8x256xf32>
    %240 = arith.mulf %238, %239 : vector<8x256xf32>
    %241 = vector.broadcast %21 : vector<1x256xf32> to vector<8x256xf32>
    %242 = arith.addf %240, %241 : vector<8x256xf32>
    %243 = vector.extract_strided_slice %242 {offsets = [0, 0], sizes = [8, 64], strides = [1, 1]} : vector<8x256xf32> to vector<8x64xf32>
    %244 = vector.extract_strided_slice %242 {offsets = [0, 64], sizes = [8, 64], strides = [1, 1]} : vector<8x256xf32> to vector<8x64xf32>
    %245 = vector.extract_strided_slice %242 {offsets = [0, 128], sizes = [8, 64], strides = [1, 1]} : vector<8x256xf32> to vector<8x64xf32>
    %246 = vector.extract_strided_slice %242 {offsets = [0, 192], sizes = [8, 64], strides = [1, 1]} : vector<8x256xf32> to vector<8x64xf32>
    %247 = arith.mulf %244, %201 : vector<8x64xf32>
    %248 = arith.mulf %243, %245 : vector<8x64xf32>
    %249 = arith.addf %247, %248 : vector<8x64xf32>
    %250 = math.tanh %249 : vector<8x64xf32>
    %251 = arith.mulf %246, %250 : vector<8x64xf32>
    %252 = arith.truncf %251 : vector<8x64xf32> to vector<8x64xbf16>
    %c0_67 = arith.constant 0 : index
    %c0_68 = arith.constant 0 : index
    %253 = vector.load %arg4[%c0_67, %c0_68] : memref<64x128xbf16, #tpu.memory_space<vmem>>, vector<64x128xbf16>
    %cst_69 = arith.constant dense<0.000000e+00> : vector<8x128xf32>
    %254 = tpu.matmul %252, %253, %cst_69 {dimension_numbers = #tpu.dot_dimension_numbers<[1], [0], [0], [1], [0, 0, 1, 1], [], []>} : vector<8x64xbf16>, vector<64x128xbf16>, vector<8x128xf32> -> vector<8x128xf32>
    %255 = arith.truncf %227 : vector<8x32xf32> to vector<8x32xbf16>
    %c0_70 = arith.constant 0 : index
    %c0_71 = arith.constant 0 : index
    %256 = vector.load %arg5[%c0_70, %c0_71] : memref<32x128xbf16, #tpu.memory_space<vmem>>, vector<32x128xbf16>
    %cst_72 = arith.constant dense<0.000000e+00> : vector<8x128xf32>
    %257 = tpu.matmul %255, %256, %cst_72 {dimension_numbers = #tpu.dot_dimension_numbers<[1], [0], [0], [1], [0, 0, 1, 1], [], []>} : vector<8x32xbf16>, vector<32x128xbf16>, vector<8x128xf32> -> vector<8x128xf32>
    %258 = arith.addf %254, %257 : vector<8x128xf32>
    %259 = arith.addf %258, %9 : vector<8x128xf32>
    %260 = vector.broadcast %30 : vector<1x128xf32> to vector<8x128xf32>
    %261 = arith.mulf %259, %260 : vector<8x128xf32>
    %262 = math.tanh %261 : vector<8x128xf32>
    %263 = vector.broadcast %30 : vector<1x128xf32> to vector<8x128xf32>
    %264 = arith.mulf %262, %263 : vector<8x128xf32>
    %265 = vector.broadcast %33 : vector<1x128xf32> to vector<8x128xf32>
    %266 = arith.addf %264, %265 : vector<8x128xf32>
    %267 = vector.extract_strided_slice %266 {offsets = [0, 0], sizes = [8, 32], strides = [1, 1]} : vector<8x128xf32> to vector<8x32xf32>
    %268 = vector.extract_strided_slice %266 {offsets = [0, 32], sizes = [8, 32], strides = [1, 1]} : vector<8x128xf32> to vector<8x32xf32>
    %269 = vector.extract_strided_slice %266 {offsets = [0, 64], sizes = [8, 32], strides = [1, 1]} : vector<8x128xf32> to vector<8x32xf32>
    %270 = vector.extract_strided_slice %266 {offsets = [0, 96], sizes = [8, 32], strides = [1, 1]} : vector<8x128xf32> to vector<8x32xf32>
    %271 = arith.mulf %268, %225 : vector<8x32xf32>
    %272 = arith.mulf %267, %269 : vector<8x32xf32>
    %273 = arith.addf %271, %272 : vector<8x32xf32>
    %274 = math.tanh %273 : vector<8x32xf32>
    %275 = arith.mulf %270, %274 : vector<8x32xf32>
    %c5_i32 = arith.constant 5 : i32
    %c8_i32_73 = arith.constant 8 : i32
    %276 = arith.muli %c5_i32, %c8_i32_73 : i32
    %277 = tpu.assume_multiple %276, 8 : i32
    %278 = arith.index_cast %277 : i32 to index
    %c0_74 = arith.constant 0 : index
    %279 = vector.load %arg12[%278, %c0_74] : memref<64x256xf32, #tpu.memory_space<vmem>>, vector<8x256xf32>
    %280 = arith.truncf %251 : vector<8x64xf32> to vector<8x64xbf16>
    %c0_75 = arith.constant 0 : index
    %c0_76 = arith.constant 0 : index
    %281 = vector.load %arg3[%c0_75, %c0_76] : memref<64x256xbf16, #tpu.memory_space<vmem>>, vector<64x256xbf16>
    %cst_77 = arith.constant dense<0.000000e+00> : vector<8x256xf32>
    %282 = tpu.matmul %280, %281, %cst_77 {dimension_numbers = #tpu.dot_dimension_numbers<[1], [0], [0], [1], [0, 0, 1, 1], [], []>} : vector<8x64xbf16>, vector<64x256xbf16>, vector<8x256xf32> -> vector<8x256xf32>
    %283 = arith.addf %279, %282 : vector<8x256xf32>
    %284 = vector.broadcast %18 : vector<1x256xf32> to vector<8x256xf32>
    %285 = arith.mulf %283, %284 : vector<8x256xf32>
    %286 = math.tanh %285 : vector<8x256xf32>
    %287 = vector.broadcast %18 : vector<1x256xf32> to vector<8x256xf32>
    %288 = arith.mulf %286, %287 : vector<8x256xf32>
    %289 = vector.broadcast %21 : vector<1x256xf32> to vector<8x256xf32>
    %290 = arith.addf %288, %289 : vector<8x256xf32>
    %291 = vector.extract_strided_slice %290 {offsets = [0, 0], sizes = [8, 64], strides = [1, 1]} : vector<8x256xf32> to vector<8x64xf32>
    %292 = vector.extract_strided_slice %290 {offsets = [0, 64], sizes = [8, 64], strides = [1, 1]} : vector<8x256xf32> to vector<8x64xf32>
    %293 = vector.extract_strided_slice %290 {offsets = [0, 128], sizes = [8, 64], strides = [1, 1]} : vector<8x256xf32> to vector<8x64xf32>
    %294 = vector.extract_strided_slice %290 {offsets = [0, 192], sizes = [8, 64], strides = [1, 1]} : vector<8x256xf32> to vector<8x64xf32>
    %295 = arith.mulf %292, %249 : vector<8x64xf32>
    %296 = arith.mulf %291, %293 : vector<8x64xf32>
    %297 = arith.addf %295, %296 : vector<8x64xf32>
    %298 = math.tanh %297 : vector<8x64xf32>
    %299 = arith.mulf %294, %298 : vector<8x64xf32>
    %300 = arith.truncf %299 : vector<8x64xf32> to vector<8x64xbf16>
    %c0_78 = arith.constant 0 : index
    %c0_79 = arith.constant 0 : index
    %301 = vector.load %arg4[%c0_78, %c0_79] : memref<64x128xbf16, #tpu.memory_space<vmem>>, vector<64x128xbf16>
    %cst_80 = arith.constant dense<0.000000e+00> : vector<8x128xf32>
    %302 = tpu.matmul %300, %301, %cst_80 {dimension_numbers = #tpu.dot_dimension_numbers<[1], [0], [0], [1], [0, 0, 1, 1], [], []>} : vector<8x64xbf16>, vector<64x128xbf16>, vector<8x128xf32> -> vector<8x128xf32>
    %303 = arith.truncf %275 : vector<8x32xf32> to vector<8x32xbf16>
    %c0_81 = arith.constant 0 : index
    %c0_82 = arith.constant 0 : index
    %304 = vector.load %arg5[%c0_81, %c0_82] : memref<32x128xbf16, #tpu.memory_space<vmem>>, vector<32x128xbf16>
    %cst_83 = arith.constant dense<0.000000e+00> : vector<8x128xf32>
    %305 = tpu.matmul %303, %304, %cst_83 {dimension_numbers = #tpu.dot_dimension_numbers<[1], [0], [0], [1], [0, 0, 1, 1], [], []>} : vector<8x32xbf16>, vector<32x128xbf16>, vector<8x128xf32> -> vector<8x128xf32>
    %306 = arith.addf %302, %305 : vector<8x128xf32>
    %307 = arith.addf %306, %9 : vector<8x128xf32>
    %308 = vector.broadcast %30 : vector<1x128xf32> to vector<8x128xf32>
    %309 = arith.mulf %307, %308 : vector<8x128xf32>
    %310 = math.tanh %309 : vector<8x128xf32>
    %311 = vector.broadcast %30 : vector<1x128xf32> to vector<8x128xf32>
    %312 = arith.mulf %310, %311 : vector<8x128xf32>
    %313 = vector.broadcast %33 : vector<1x128xf32> to vector<8x128xf32>
    %314 = arith.addf %312, %313 : vector<8x128xf32>
    %315 = vector.extract_strided_slice %314 {offsets = [0, 0], sizes = [8, 32], strides = [1, 1]} : vector<8x128xf32> to vector<8x32xf32>
    %316 = vector.extract_strided_slice %314 {offsets = [0, 32], sizes = [8, 32], strides = [1, 1]} : vector<8x128xf32> to vector<8x32xf32>
    %317 = vector.extract_strided_slice %314 {offsets = [0, 64], sizes = [8, 32], strides = [1, 1]} : vector<8x128xf32> to vector<8x32xf32>
    %318 = vector.extract_strided_slice %314 {offsets = [0, 96], sizes = [8, 32], strides = [1, 1]} : vector<8x128xf32> to vector<8x32xf32>
    %319 = arith.mulf %316, %273 : vector<8x32xf32>
    %320 = arith.mulf %315, %317 : vector<8x32xf32>
    %321 = arith.addf %319, %320 : vector<8x32xf32>
    %322 = math.tanh %321 : vector<8x32xf32>
    %323 = arith.mulf %318, %322 : vector<8x32xf32>
    %c6_i32 = arith.constant 6 : i32
    %c8_i32_84 = arith.constant 8 : i32
    %324 = arith.muli %c6_i32, %c8_i32_84 : i32
    %325 = tpu.assume_multiple %324, 8 : i32
    %326 = arith.index_cast %325 : i32 to index
    %c0_85 = arith.constant 0 : index
    %327 = vector.load %arg12[%326, %c0_85] : memref<64x256xf32, #tpu.memory_space<vmem>>, vector<8x256xf32>
    %328 = arith.truncf %299 : vector<8x64xf32> to vector<8x64xbf16>
    %c0_86 = arith.constant 0 : index
    %c0_87 = arith.constant 0 : index
    %329 = vector.load %arg3[%c0_86, %c0_87] : memref<64x256xbf16, #tpu.memory_space<vmem>>, vector<64x256xbf16>
    %cst_88 = arith.constant dense<0.000000e+00> : vector<8x256xf32>
    %330 = tpu.matmul %328, %329, %cst_88 {dimension_numbers = #tpu.dot_dimension_numbers<[1], [0], [0], [1], [0, 0, 1, 1], [], []>} : vector<8x64xbf16>, vector<64x256xbf16>, vector<8x256xf32> -> vector<8x256xf32>
    %331 = arith.addf %327, %330 : vector<8x256xf32>
    %332 = vector.broadcast %18 : vector<1x256xf32> to vector<8x256xf32>
    %333 = arith.mulf %331, %332 : vector<8x256xf32>
    %334 = math.tanh %333 : vector<8x256xf32>
    %335 = vector.broadcast %18 : vector<1x256xf32> to vector<8x256xf32>
    %336 = arith.mulf %334, %335 : vector<8x256xf32>
    %337 = vector.broadcast %21 : vector<1x256xf32> to vector<8x256xf32>
    %338 = arith.addf %336, %337 : vector<8x256xf32>
    %339 = vector.extract_strided_slice %338 {offsets = [0, 0], sizes = [8, 64], strides = [1, 1]} : vector<8x256xf32> to vector<8x64xf32>
    %340 = vector.extract_strided_slice %338 {offsets = [0, 64], sizes = [8, 64], strides = [1, 1]} : vector<8x256xf32> to vector<8x64xf32>
    %341 = vector.extract_strided_slice %338 {offsets = [0, 128], sizes = [8, 64], strides = [1, 1]} : vector<8x256xf32> to vector<8x64xf32>
    %342 = vector.extract_strided_slice %338 {offsets = [0, 192], sizes = [8, 64], strides = [1, 1]} : vector<8x256xf32> to vector<8x64xf32>
    %343 = arith.mulf %340, %297 : vector<8x64xf32>
    %344 = arith.mulf %339, %341 : vector<8x64xf32>
    %345 = arith.addf %343, %344 : vector<8x64xf32>
    %346 = math.tanh %345 : vector<8x64xf32>
    %347 = arith.mulf %342, %346 : vector<8x64xf32>
    %348 = arith.truncf %347 : vector<8x64xf32> to vector<8x64xbf16>
    %c0_89 = arith.constant 0 : index
    %c0_90 = arith.constant 0 : index
    %349 = vector.load %arg4[%c0_89, %c0_90] : memref<64x128xbf16, #tpu.memory_space<vmem>>, vector<64x128xbf16>
    %cst_91 = arith.constant dense<0.000000e+00> : vector<8x128xf32>
    %350 = tpu.matmul %348, %349, %cst_91 {dimension_numbers = #tpu.dot_dimension_numbers<[1], [0], [0], [1], [0, 0, 1, 1], [], []>} : vector<8x64xbf16>, vector<64x128xbf16>, vector<8x128xf32> -> vector<8x128xf32>
    %351 = arith.truncf %323 : vector<8x32xf32> to vector<8x32xbf16>
    %c0_92 = arith.constant 0 : index
    %c0_93 = arith.constant 0 : index
    %352 = vector.load %arg5[%c0_92, %c0_93] : memref<32x128xbf16, #tpu.memory_space<vmem>>, vector<32x128xbf16>
    %cst_94 = arith.constant dense<0.000000e+00> : vector<8x128xf32>
    %353 = tpu.matmul %351, %352, %cst_94 {dimension_numbers = #tpu.dot_dimension_numbers<[1], [0], [0], [1], [0, 0, 1, 1], [], []>} : vector<8x32xbf16>, vector<32x128xbf16>, vector<8x128xf32> -> vector<8x128xf32>
    %354 = arith.addf %350, %353 : vector<8x128xf32>
    %355 = arith.addf %354, %9 : vector<8x128xf32>
    %356 = vector.broadcast %30 : vector<1x128xf32> to vector<8x128xf32>
    %357 = arith.mulf %355, %356 : vector<8x128xf32>
    %358 = math.tanh %357 : vector<8x128xf32>
    %359 = vector.broadcast %30 : vector<1x128xf32> to vector<8x128xf32>
    %360 = arith.mulf %358, %359 : vector<8x128xf32>
    %361 = vector.broadcast %33 : vector<1x128xf32> to vector<8x128xf32>
    %362 = arith.addf %360, %361 : vector<8x128xf32>
    %363 = vector.extract_strided_slice %362 {offsets = [0, 0], sizes = [8, 32], strides = [1, 1]} : vector<8x128xf32> to vector<8x32xf32>
    %364 = vector.extract_strided_slice %362 {offsets = [0, 32], sizes = [8, 32], strides = [1, 1]} : vector<8x128xf32> to vector<8x32xf32>
    %365 = vector.extract_strided_slice %362 {offsets = [0, 64], sizes = [8, 32], strides = [1, 1]} : vector<8x128xf32> to vector<8x32xf32>
    %366 = vector.extract_strided_slice %362 {offsets = [0, 96], sizes = [8, 32], strides = [1, 1]} : vector<8x128xf32> to vector<8x32xf32>
    %367 = arith.mulf %364, %321 : vector<8x32xf32>
    %368 = arith.mulf %363, %365 : vector<8x32xf32>
    %369 = arith.addf %367, %368 : vector<8x32xf32>
    %370 = math.tanh %369 : vector<8x32xf32>
    %371 = arith.mulf %366, %370 : vector<8x32xf32>
    %c7_i32 = arith.constant 7 : i32
    %c8_i32_95 = arith.constant 8 : i32
    %372 = arith.muli %c7_i32, %c8_i32_95 : i32
    %373 = tpu.assume_multiple %372, 8 : i32
    %374 = arith.index_cast %373 : i32 to index
    %c0_96 = arith.constant 0 : index
    %375 = vector.load %arg12[%374, %c0_96] : memref<64x256xf32, #tpu.memory_space<vmem>>, vector<8x256xf32>
    %376 = arith.truncf %347 : vector<8x64xf32> to vector<8x64xbf16>
    %c0_97 = arith.constant 0 : index
    %c0_98 = arith.constant 0 : index
    %377 = vector.load %arg3[%c0_97, %c0_98] : memref<64x256xbf16, #tpu.memory_space<vmem>>, vector<64x256xbf16>
    %cst_99 = arith.constant dense<0.000000e+00> : vector<8x256xf32>
    %378 = tpu.matmul %376, %377, %cst_99 {dimension_numbers = #tpu.dot_dimension_numbers<[1], [0], [0], [1], [0, 0, 1, 1], [], []>} : vector<8x64xbf16>, vector<64x256xbf16>, vector<8x256xf32> -> vector<8x256xf32>
    %379 = arith.addf %375, %378 : vector<8x256xf32>
    %380 = vector.broadcast %18 : vector<1x256xf32> to vector<8x256xf32>
    %381 = arith.mulf %379, %380 : vector<8x256xf32>
    %382 = math.tanh %381 : vector<8x256xf32>
    %383 = vector.broadcast %18 : vector<1x256xf32> to vector<8x256xf32>
    %384 = arith.mulf %382, %383 : vector<8x256xf32>
    %385 = vector.broadcast %21 : vector<1x256xf32> to vector<8x256xf32>
    %386 = arith.addf %384, %385 : vector<8x256xf32>
    %387 = vector.extract_strided_slice %386 {offsets = [0, 0], sizes = [8, 64], strides = [1, 1]} : vector<8x256xf32> to vector<8x64xf32>
    %388 = vector.extract_strided_slice %386 {offsets = [0, 64], sizes = [8, 64], strides = [1, 1]} : vector<8x256xf32> to vector<8x64xf32>
    %389 = vector.extract_strided_slice %386 {offsets = [0, 128], sizes = [8, 64], strides = [1, 1]} : vector<8x256xf32> to vector<8x64xf32>
    %390 = vector.extract_strided_slice %386 {offsets = [0, 192], sizes = [8, 64], strides = [1, 1]} : vector<8x256xf32> to vector<8x64xf32>
    %391 = arith.mulf %388, %345 : vector<8x64xf32>
    %392 = arith.mulf %387, %389 : vector<8x64xf32>
    %393 = arith.addf %391, %392 : vector<8x64xf32>
    %394 = math.tanh %393 : vector<8x64xf32>
    %395 = arith.mulf %390, %394 : vector<8x64xf32>
    %396 = arith.truncf %395 : vector<8x64xf32> to vector<8x64xbf16>
    %c0_100 = arith.constant 0 : index
    %c0_101 = arith.constant 0 : index
    %397 = vector.load %arg4[%c0_100, %c0_101] : memref<64x128xbf16, #tpu.memory_space<vmem>>, vector<64x128xbf16>
    %cst_102 = arith.constant dense<0.000000e+00> : vector<8x128xf32>
    %398 = tpu.matmul %396, %397, %cst_102 {dimension_numbers = #tpu.dot_dimension_numbers<[1], [0], [0], [1], [0, 0, 1, 1], [], []>} : vector<8x64xbf16>, vector<64x128xbf16>, vector<8x128xf32> -> vector<8x128xf32>
    %399 = arith.truncf %371 : vector<8x32xf32> to vector<8x32xbf16>
    %c0_103 = arith.constant 0 : index
    %c0_104 = arith.constant 0 : index
    %400 = vector.load %arg5[%c0_103, %c0_104] : memref<32x128xbf16, #tpu.memory_space<vmem>>, vector<32x128xbf16>
    %cst_105 = arith.constant dense<0.000000e+00> : vector<8x128xf32>
    %401 = tpu.matmul %399, %400, %cst_105 {dimension_numbers = #tpu.dot_dimension_numbers<[1], [0], [0], [1], [0, 0, 1, 1], [], []>} : vector<8x32xbf16>, vector<32x128xbf16>, vector<8x128xf32> -> vector<8x128xf32>
    %402 = arith.addf %398, %401 : vector<8x128xf32>
    %403 = arith.addf %402, %9 : vector<8x128xf32>
    %404 = vector.broadcast %30 : vector<1x128xf32> to vector<8x128xf32>
    %405 = arith.mulf %403, %404 : vector<8x128xf32>
    %406 = math.tanh %405 : vector<8x128xf32>
    %407 = vector.broadcast %30 : vector<1x128xf32> to vector<8x128xf32>
    %408 = arith.mulf %406, %407 : vector<8x128xf32>
    %409 = vector.broadcast %33 : vector<1x128xf32> to vector<8x128xf32>
    %410 = arith.addf %408, %409 : vector<8x128xf32>
    %411 = vector.extract_strided_slice %410 {offsets = [0, 0], sizes = [8, 32], strides = [1, 1]} : vector<8x128xf32> to vector<8x32xf32>
    %412 = vector.extract_strided_slice %410 {offsets = [0, 32], sizes = [8, 32], strides = [1, 1]} : vector<8x128xf32> to vector<8x32xf32>
    %413 = vector.extract_strided_slice %410 {offsets = [0, 64], sizes = [8, 32], strides = [1, 1]} : vector<8x128xf32> to vector<8x32xf32>
    %414 = vector.extract_strided_slice %410 {offsets = [0, 96], sizes = [8, 32], strides = [1, 1]} : vector<8x128xf32> to vector<8x32xf32>
    %415 = arith.mulf %412, %369 : vector<8x32xf32>
    %416 = arith.mulf %411, %413 : vector<8x32xf32>
    %417 = arith.addf %415, %416 : vector<8x32xf32>
    %418 = math.tanh %417 : vector<8x32xf32>
    %419 = arith.mulf %414, %418 : vector<8x32xf32>
    %c8_i32_106 = arith.constant 8 : i32
    %c0_107 = arith.constant 0 : index
    %c0_108 = arith.constant 0 : index
    %420 = vector.load %arg7[%c0_107, %c0_108] : memref<32x16xf32, #tpu.memory_space<vmem>>, vector<32x16xf32>
    %cst_109 = arith.constant dense<0.000000e+00> : vector<8x16xf32>
    %421 = tpu.matmul %419, %420, %cst_109 {dimension_numbers = #tpu.dot_dimension_numbers<[1], [0], [0], [1], [0, 0, 1, 1], [], []>} : vector<8x32xf32>, vector<32x16xf32>, vector<8x16xf32> -> vector<8x16xf32>
    %c0_110 = arith.constant 0 : index
    %c0_111 = arith.constant 0 : index
    %422 = vector.load %arg8[%c0_110, %c0_111] : memref<1x16xf32, #tpu.memory_space<vmem>>, vector<1x16xf32>
    %423 = vector.broadcast %422 : vector<1x16xf32> to vector<8x16xf32>
    %424 = arith.addf %421, %423 : vector<8x16xf32>
    %cst_112 = arith.constant 0.000000e+00 : f32
    %425 = vector.broadcast %cst_112 : f32 to vector<8x16xf32>
    %426 = arith.maximumf %424, %425 : vector<8x16xf32>
    %c0_113 = arith.constant 0 : index
    %c0_114 = arith.constant 0 : index
    %427 = vector.load %arg9[%c0_113, %c0_114] : memref<16x1xf32, #tpu.memory_space<vmem>>, vector<16x1xf32>
    %cst_115 = arith.constant dense<0.000000e+00> : vector<8x1xf32>
    %428 = tpu.matmul %426, %427, %cst_115 {dimension_numbers = #tpu.dot_dimension_numbers<[1], [0], [0], [1], [0, 0, 1, 1], [], []>} : vector<8x16xf32>, vector<16x1xf32>, vector<8x1xf32> -> vector<8x1xf32>
    %c0_116 = arith.constant 0 : index
    %c0_117 = arith.constant 0 : index
    %429 = vector.load %arg10[%c0_116, %c0_117] : memref<1x1xf32, #tpu.memory_space<vmem>>, vector<1x1xf32>
    %430 = vector.broadcast %429 : vector<1x1xf32> to vector<8x1xf32>
    %431 = arith.addf %428, %430 : vector<8x1xf32>
    %c0_118 = arith.constant 0 : index
    %c0_119 = arith.constant 0 : index
    %432 = vector.load %arg11[%c0_118, %c0_119] : memref<8x1xf32, #tpu.memory_space<vmem>>, vector<8x1xf32>
    tpu.vector_store %arg11[%c0_118, %c0_119], %431 {strides = array<i32>} : memref<8x1xf32, #tpu.memory_space<vmem>>, vector<8x1xf32>,
    return
  }
}

</mosaic_0001>

<llo_original>
// kernel: lstm_model_forward.1
$region0: #{lstm_model_forward.1}
  #allocation0 [shape = 'u32[]', space=smem, size = 0x4, offset = 0x4, fixed_abs, tag = 'smem constant byte address 0x4 - core index']
  #allocation1 [shape = 'u32[72,128]{1,0:T(1,128)}', space=vmem, size = 0x9000, scoped, tag = 'internal scratch']
  #allocation2 [shape = 'f32[64,256]{1,0:T(8,128)}', space=vmem, size = 0x10000, scoped, tag = 'scratch operand']
  #allocation3 [shape = 'f32[1,1]{1,0:T(1,128)S(1)}', space=vmem, size = 0x200, scoped, tag = 'scoped memory for lstm_model_forward.1']
  %s0 = inlined_call_operand.vmem [shape: bf16[64,8], index: 0, kind: input, shape index: {}]
  %s1 = inlined_call_operand.vmem [shape: bf16[8,256], index: 1, kind: input, shape index: {}]
  %s2 = inlined_call_operand.vmem [shape: f32[1,256], index: 2, kind: input, shape index: {}]
  %s3 = inlined_call_operand.vmem [shape: bf16[64,256], index: 3, kind: input, shape index: {}]
  %s4 = inlined_call_operand.vmem [shape: bf16[64,128], index: 4, kind: input, shape index: {}]
  %s5 = inlined_call_operand.vmem [shape: bf16[32,128], index: 5, kind: input, shape index: {}]
  %s6 = inlined_call_operand.vmem [shape: f32[1,128], index: 6, kind: input, shape index: {}]
  %s7 = inlined_call_operand.vmem [shape: f32[32,16], index: 7, kind: input, shape index: {}]
  %s8 = inlined_call_operand.vmem [shape: f32[1,16], index: 8, kind: input, shape index: {}]
  %s9 = inlined_call_operand.vmem [shape: f32[16,1], index: 9, kind: input, shape index: {}]
  %s10 = inlined_call_operand.<no memory space> [shape: f32[1,1], index: 10, kind: input, shape index: {}]
  %s11 = inlined_call_operand.vmem [shape: f32[8,1], index: 11, kind: output, shape index: {}]
  %s12 = sld [smem:[#allocation0]]
  $region54: #{lstm_model_forward.1} parent=0
    _
  %s14 = ssub.s32 1, %s12
  %s15 = scalar_select 0, %s14, %s12
  %v16 = vstv %s10
  %17 = vst [vmem:[#allocation3] sm:$0x1] %v16
  // Predicated region
  $region2: #{lstm_model_forward.1} parent=0 // pred_check
    _
  $region3: #{lstm_model_forward.1} parent=0 // pred_check_branch
    %19 = sbr.rel (0) target = $region5
  $region4: #{lstm_model_forward.1} parent=0 // pred_region
    _
  $region5: #{lstm_model_forward.1} parent=0 // pred_fallthru
    _
  // Predicated region
  $region6: #{lstm_model_forward.1} parent=0 // pred_check
    _
  $region7: #{lstm_model_forward.1} parent=0 // pred_check_branch
    %21 = sbr.rel (0) target = $region9
  $region8: #{lstm_model_forward.1} parent=0 // pred_region
    _
  $region9: #{lstm_model_forward.1} parent=0 // pred_fallthru
    _
  // Predicated region
  $region10: #{lstm_model_forward.1} parent=0 // pred_check
    _
  $region11: #{lstm_model_forward.1} parent=0 // pred_check_branch
    %23 = sbr.rel (0) target = $region13
  $region12: #{lstm_model_forward.1} parent=0 // pred_region
    _
  $region13: #{lstm_model_forward.1} parent=0 // pred_fallthru
    _
  // Predicated region
  $region14: #{lstm_model_forward.1} parent=0 // pred_check
    _
  $region15: #{lstm_model_forward.1} parent=0 // pred_check_branch
    %25 = sbr.rel (0) target = $region17
  $region16: #{lstm_model_forward.1} parent=0 // pred_region
    _
  $region17: #{lstm_model_forward.1} parent=0 // pred_fallthru
    _
  // Predicated region
  $region18: #{lstm_model_forward.1} parent=0 // pred_check
    _
  $region19: #{lstm_model_forward.1} parent=0 // pred_check_branch
    %27 = sbr.rel (0) target = $region21
  $region20: #{lstm_model_forward.1} parent=0 // pred_region
    _
  $region21: #{lstm_model_forward.1} parent=0 // pred_fallthru
    _
  // Predicated region
  $region22: #{lstm_model_forward.1} parent=0 // pred_check
    _
  $region23: #{lstm_model_forward.1} parent=0 // pred_check_branch
    %29 = sbr.rel (0) target = $region25
  $region24: #{lstm_model_forward.1} parent=0 // pred_region
    _
  $region25: #{lstm_model_forward.1} parent=0 // pred_fallthru
    _
  // Predicated region
  $region26: #{lstm_model_forward.1} parent=0 // pred_check
    _
  $region27: #{lstm_model_forward.1} parent=0 // pred_check_branch
    %31 = sbr.rel (0) target = $region29
  $region28: #{lstm_model_forward.1} parent=0 // pred_region
    _
  $region29: #{lstm_model_forward.1} parent=0 // pred_fallthru
    _
  // Predicated region
  $region30: #{lstm_model_forward.1} parent=0 // pred_check
    _
  $region31: #{lstm_model_forward.1} parent=0 // pred_check_branch
    %33 = sbr.rel (0) target = $region33
  $region32: #{lstm_model_forward.1} parent=0 // pred_region
    _
  $region33: #{lstm_model_forward.1} parent=0 // pred_fallthru
    _
  // Predicated region
  $region34: #{lstm_model_forward.1} parent=0 // pred_check
    _
  $region35: #{lstm_model_forward.1} parent=0 // pred_check_branch
    %35 = sbr.rel (0) target = $region37
  $region36: #{lstm_model_forward.1} parent=0 // pred_region
    _
  $region37: #{lstm_model_forward.1} parent=0 // pred_fallthru
    _
  // Predicated region
  $region38: #{lstm_model_forward.1} parent=0 // pred_check
    _
  $region39: #{lstm_model_forward.1} parent=0 // pred_check_branch
    %37 = sbr.rel (0) target = $region41
  $region40: #{lstm_model_forward.1} parent=0 // pred_region
    _
  $region41: #{lstm_model_forward.1} parent=0 // pred_fallthru
    _
  // Predicated region
  $region42: #{lstm_model_forward.1} parent=0 // pred_check
    _
  $region43: #{lstm_model_forward.1} parent=0 // pred_check_branch
    %39 = sbr.rel (0) target = $region45
  $region44: #{lstm_model_forward.1} parent=0 // pred_region
    _
  $region45: #{lstm_model_forward.1} parent=0 // pred_fallthru
    _
  %v41 = vld [vmem:[%s0] sm:$0xf]
  %v42 = vld [vmem:[%s0 + $0x4] sm:$0xf]
  %v43 = vld [vmem:[%s0 + $0x8] sm:$0xf]
  %v44 = vld [vmem:[%s0 + $0xc] sm:$0xf]
  %v45 = vld [vmem:[%s0 + $0x10] sm:$0xf]
  %v46 = vld [vmem:[%s0 + $0x14] sm:$0xf]
  %v47 = vld [vmem:[%s0 + $0x18] sm:$0xf]
  %v48 = vld [vmem:[%s0 + $0x1c] sm:$0xf]
  %v49 = vld [vmem:[%s1] sm:$0xff]
  %v50 = vld [vmem:[%s2] sm:$0x3]
  %v52 = vperm.slane %v50, 0
  %v53 = vperm.slane %v50, 1
  %v64 = vunpack.c.l.b16 %v41
  %v65 = vunpack.c.l.b16 %v42
  %v66 = vunpack.c.l.b16 %v43
  %v67 = vunpack.c.l.b16 %v44
  %v68 = vunpack.c.l.b16 %v45
  %v69 = vunpack.c.l.b16 %v46
  %v70 = vunpack.c.l.b16 %v47
  %v71 = vunpack.c.l.b16 %v48
  %v72 = vpack.c.b16 %v65, %v64
  %v73 = vpack.c.b16 %v67, %v66
  %v74 = vpack.c.b16 %v69, %v68
  %v75 = vpack.c.b16 %v71, %v70
  %v77 = vunpack.c.l.b16 %v49
  %v78 = vunpack.c.h.b16 %v49
  %v79 = vpack.c.b16 %v77, %v77
  %v80 = vpack.c.b16 %v78, %v78
  %vm81 = vcmask 64512
  %v83 = vsel %vm81, %v72, 0
  %v86 = vsel %vm81, %v73, 0
  %v89 = vsel %vm81, %v74, 0
  %v92 = vsel %vm81, %v75, 0
  %vm94 = vcmask 1043456
  %v96 = vsel %vm94, %v79, 0
  %v99 = vsel %vm94, %v80, 0
  %101 = vmatpush.bf16.msra.mxu0 0
  %102 = vmatpush.bf16.msra.mxu0 0
  %103 = vmatpush.bf16.msra.mxu0 0
  %104 = vmatpush.bf16.msra.mxu0 0
  %105 = vmatpush.bf16.msra.mxu0 0
  %106 = vmatpush.bf16.msra.mxu0 0
  %107 = vmatpush.bf16.msra.mxu0 0
  %108 = vmatpush.bf16.msra.mxu0 %v96
  %109 = vmatmul.bf16.gmra.mxu0 %v83
  %v110 = vpop.f32.mrf.mxu0
  %v111 = vadd.f32 %v52, %v110
  %v112 = vpop.f32.mrf.mxu0
  %v113 = vadd.f32 %v52, %v112
  %114 = vmatmul.bf16.gmra.mxu0 %v86
  %v115 = vpop.f32.mrf.mxu0
  %v116 = vadd.f32 %v52, %v115
  %v117 = vpop.f32.mrf.mxu0
  %v118 = vadd.f32 %v52, %v117
  %119 = vmatmul.bf16.gmra.mxu0 %v89
  %v120 = vpop.f32.mrf.mxu0
  %v121 = vadd.f32 %v52, %v120
  %v122 = vpop.f32.mrf.mxu0
  %v123 = vadd.f32 %v52, %v122
  %124 = vmatmul.bf16.gmra.mxu0 %v92
  %v125 = vpop.f32.mrf.mxu0
  %v126 = vadd.f32 %v52, %v125
  %v127 = vpop.f32.mrf.mxu0
  %v128 = vadd.f32 %v52, %v127
  %129 = vdwg.mxu0
  %130 = vmatpush.bf16.msra.mxu0 0
  %131 = vmatpush.bf16.msra.mxu0 0
  %132 = vmatpush.bf16.msra.mxu0 0
  %133 = vmatpush.bf16.msra.mxu0 0
  %134 = vmatpush.bf16.msra.mxu0 0
  %135 = vmatpush.bf16.msra.mxu0 0
  %136 = vmatpush.bf16.msra.mxu0 0
  %137 = vmatpush.bf16.msra.mxu0 %v99
  %138 = vmatmul.bf16.gmra.mxu0 %v83
  %v139 = vpop.f32.mrf.mxu0
  %v140 = vadd.f32 %v53, %v139
  %v141 = vpop.f32.mrf.mxu0
  %v142 = vadd.f32 %v53, %v141
  %143 = vmatmul.bf16.gmra.mxu0 %v86
  %v144 = vpop.f32.mrf.mxu0
  %v145 = vadd.f32 %v53, %v144
  %v146 = vpop.f32.mrf.mxu0
  %v147 = vadd.f32 %v53, %v146
  %148 = vmatmul.bf16.gmra.mxu0 %v89
  %v149 = vpop.f32.mrf.mxu0
  %v150 = vadd.f32 %v53, %v149
  %v151 = vpop.f32.mrf.mxu0
  %v152 = vadd.f32 %v53, %v151
  %153 = vmatmul.bf16.gmra.mxu0 %v92
  %v154 = vpop.f32.mrf.mxu0
  %v155 = vadd.f32 %v53, %v154
  %v156 = vpop.f32.mrf.mxu0
  %v157 = vadd.f32 %v53, %v156
  %158 = vdwg.mxu0
  %159 = vst [vmem:[#allocation2] sm:$0xff] %v111
  %160 = vst [vmem:[#allocation2 + $0x8] sm:$0xff] %v140
  %161 = vst [vmem:[#allocation2 + $0x10] sm:$0xff] %v113
  %162 = vst [vmem:[#allocation2 + $0x18] sm:$0xff] %v142
  %163 = vst [vmem:[#allocation2 + $0x20] sm:$0xff] %v116
  %164 = vst [vmem:[#allocation2 + $0x28] sm:$0xff] %v145
  %165 = vst [vmem:[#allocation2 + $0x30] sm:$0xff] %v118
  %166 = vst [vmem:[#allocation2 + $0x38] sm:$0xff] %v147
  %167 = vst [vmem:[#allocation2 + $0x40] sm:$0xff] %v121
  %168 = vst [vmem:[#allocation2 + $0x48] sm:$0xff] %v150
  %169 = vst [vmem:[#allocation2 + $0x50] sm:$0xff] %v123
  %170 = vst [vmem:[#allocation2 + $0x58] sm:$0xff] %v152
  %171 = vst [vmem:[#allocation2 + $0x60] sm:$0xff] %v126
  %172 = vst [vmem:[#allocation2 + $0x68] sm:$0xff] %v155
  %173 = vst [vmem:[#allocation2 + $0x70] sm:$0xff] %v128
  %174 = vst [vmem:[#allocation2 + $0x78] sm:$0xff] %v157
  %v175 = vld [vmem:[%s6] sm:$0x1]
  %v177 = vperm.slane %v175, 0
  %v179 = vlaneseq
  %v180 = vand.u32 %v179, 127
  %v181 = vadd.s32 %v180, 128
  %vm182 = vcmp.ge.s32.totalorder %v180, 128
  %vm183 = vcmp.ge.s32.totalorder %v181, 128
  %vm184 = vcmp.lt.s32.totalorder %v180, 192
  %vm185 = vcmp.lt.s32.totalorder %v181, 192
  %vm186 = vmand %vm182, %vm184
  %vm187 = vmand %vm183, %vm185
  %v188 = vsel %vm186, 1.0, 0.5
  %v189 = vsel %vm187, 1.0, 0.5
  %v190 = vsel %vm186, 0.0, 0.5
  %v191 = vsel %vm187, 0.0, 0.5
  %vm192 = vcmp.ge.s32.totalorder %v180, 64
  %vm193 = vcmp.lt.s32.totalorder %v180, 96
  %vm194 = vmand %vm192, %vm193
  %v195 = vsel %vm194, 1.0, 0.5
  %v196 = vsel %vm194, 0.0, 0.5
  %s197 = smul.u32 0, 2
  %s198 = smul.addr %s197, 8
  %s199 = scalar_lea.vmem [#allocation2], %s198
  %v200 = vld [vmem:[%s199] sm:$0xff]
  %v201 = vld [vmem:[%s199 + $0x8] sm:$0xff]
  %v202 = vld [vmem:[%s3] sm:$0xff]
  %v203 = vld [vmem:[%s3 + $0x8] sm:$0xff]
  %v204 = vld [vmem:[%s3 + $0x10] sm:$0xff]
  %v205 = vld [vmem:[%s3 + $0x18] sm:$0xff]
  %v206 = vld [vmem:[%s3 + $0x20] sm:$0xff]
  %v207 = vld [vmem:[%s3 + $0x28] sm:$0xff]
  %v208 = vld [vmem:[%s3 + $0x30] sm:$0xff]
  %v209 = vld [vmem:[%s3 + $0x38] sm:$0xff]
  %v218 = vunpack.c.l.b16 %v202
  %v219 = vunpack.c.h.b16 %v202
  %v220 = vunpack.c.l.b16 %v203
  %v221 = vunpack.c.h.b16 %v203
  %v222 = vunpack.c.l.b16 %v204
  %v223 = vunpack.c.h.b16 %v204
  %v224 = vunpack.c.l.b16 %v205
  %v225 = vunpack.c.h.b16 %v205
  %v226 = vunpack.c.l.b16 %v206
  %v227 = vunpack.c.h.b16 %v206
  %v228 = vunpack.c.l.b16 %v207
  %v229 = vunpack.c.h.b16 %v207
  %v230 = vunpack.c.l.b16 %v208
  %v231 = vunpack.c.h.b16 %v208
  %v232 = vunpack.c.l.b16 %v209
  %v233 = vunpack.c.h.b16 %v209
  %v234 = vpack.c.b16 %v220, %v218
  %v235 = vpack.c.b16 %v221, %v219
  %v236 = vpack.c.b16 %v224, %v222
  %v237 = vpack.c.b16 %v225, %v223
  %v238 = vpack.c.b16 %v228, %v226
  %v239 = vpack.c.b16 %v229, %v227
  %v240 = vpack.c.b16 %v232, %v230
  %v241 = vpack.c.b16 %v233, %v231
  %vm250 = vcmask 523264
  %v252 = vsel %vm250, 0, 0
  %254 = vmatpush.bf16.msra.mxu0 0
  %255 = vmatpush.bf16.msra.mxu0 0
  %256 = vmatpush.bf16.msra.mxu0 0
  %257 = vmatpush.bf16.msra.mxu0 0
  %258 = vmatpush.bf16.msra.mxu0 %v240
  %259 = vmatpush.bf16.msra.mxu0 %v238
  %260 = vmatpush.bf16.msra.mxu0 %v236
  %261 = vmatpush.bf16.msra.mxu0 %v234
  %262 = vmatmul.bf16.gmra.mxu0 %v252
  %v263 = vpop.f32.mrf.mxu0
  %v264 = vadd.f32 0.0, %v263
  %v265 = vpop.f32.mrf.mxu0
  %266 = vdwg.mxu0
  %267 = vmatpush.bf16.msra.mxu0 0
  %268 = vmatpush.bf16.msra.mxu0 0
  %269 = vmatpush.bf16.msra.mxu0 0
  %270 = vmatpush.bf16.msra.mxu0 0
  %271 = vmatpush.bf16.msra.mxu0 %v241
  %272 = vmatpush.bf16.msra.mxu0 %v239
  %273 = vmatpush.bf16.msra.mxu0 %v237
  %274 = vmatpush.bf16.msra.mxu0 %v235
  %275 = vmatmul.bf16.gmra.mxu0 %v252
  %v276 = vpop.f32.mrf.mxu0
  %v277 = vadd.f32 0.0, %v276
  %v278 = vpop.f32.mrf.mxu0
  %279 = vdwg.mxu0
  %v280 = vadd.f32 %v200, %v264
  %v281 = vadd.f32 %v201, %v277
  %v282 = vmul.f32 %v280, %v188
  %v283 = vmul.f32 %v281, %v189
  %v284 = vtanh.pop %v282
  %v285 = vtanh.pop %v283
  %v286 = vmul.f32 %v284, %v188
  %v287 = vmul.f32 %v285, %v189
  %v288 = vadd.f32 %v286, %v190
  %v289 = vadd.f32 %v287, %v191
  %v290 = vmul.f32 %v288, 0.0
  %v291 = vmul.f32 %v288, %v289
  %293 = vrot.lane.b32.xlu0 %v291, 64
  %v294 = vpop.permute.xlu0 %293
  %v296 = vadd.f32 %v290, %v294
  %v297 = vtanh.pop %v296
  %v298 = vmul.f32 %v289, %v297
  %v299 = vpack.c.bf16 %v298, %v298
  %v300 = vld [vmem:[%s4] sm:$0xf]
  %v301 = vld [vmem:[%s4 + $0x4] sm:$0xf]
  %v302 = vld [vmem:[%s4 + $0x8] sm:$0xf]
  %v303 = vld [vmem:[%s4 + $0xc] sm:$0xf]
  %v304 = vld [vmem:[%s4 + $0x10] sm:$0xf]
  %v305 = vld [vmem:[%s4 + $0x14] sm:$0xf]
  %v306 = vld [vmem:[%s4 + $0x18] sm:$0xf]
  %v307 = vld [vmem:[%s4 + $0x1c] sm:$0xf]
  %v308 = vld [vmem:[%s5] sm:$0xf]
  %v309 = vld [vmem:[%s5 + $0x4] sm:$0xf]
  %v310 = vld [vmem:[%s5 + $0x8] sm:$0xf]
  %v311 = vld [vmem:[%s5 + $0xc] sm:$0xf]
  %v316 = vunpack.c.l.b16 %v308
  %v317 = vunpack.c.l.b16 %v309
  %v318 = vunpack.c.l.b16 %v310
  %v319 = vunpack.c.l.b16 %v311
  %v320 = vpack.c.b16 %v317, %v316
  %v321 = vpack.c.b16 %v319, %v318
  %vm324 = vcmask 261120
  %v325 = vsel %vm324, 0, 0
  %327 = vmatpush.bf16.msra.mxu0 0
  %328 = vmatpush.bf16.msra.mxu0 0
  %329 = vmatpush.bf16.msra.mxu0 0
  %330 = vmatpush.bf16.msra.mxu0 0
  %331 = vmatpush.bf16.msra.mxu0 0
  %332 = vmatpush.bf16.msra.mxu0 0
  %333 = vmatpush.bf16.msra.mxu0 %v321
  %334 = vmatpush.bf16.msra.mxu0 %v320
  %335 = vmatmul.bf16.gmra.mxu0 %v325
  %v336 = vpop.f32.mrf.mxu0
  %v337 = vadd.f32 0.0, %v336
  %v338 = vpop.f32.mrf.mxu0
  %339 = vdwg.mxu0
  %341 = vrot.lane.b32.xlu0 %v299, 64
  %v342 = vpop.permute.xlu0 %341
  %v351 = vunpack.c.l.b16 %v300
  %v352 = vunpack.c.l.b16 %v301
  %v353 = vunpack.c.l.b16 %v302
  %v354 = vunpack.c.l.b16 %v303
  %v355 = vunpack.c.l.b16 %v304
  %v356 = vunpack.c.l.b16 %v305
  %v357 = vunpack.c.l.b16 %v306
  %v358 = vunpack.c.l.b16 %v307
  %v359 = vpack.c.b16 %v352, %v351
  %v360 = vpack.c.b16 %v354, %v353
  %v361 = vpack.c.b16 %v356, %v355
  %v362 = vpack.c.b16 %v358, %v357
  %v368 = vsel %vm250, %v342, 0
  %370 = vmatpush.bf16.msra.mxu0 0
  %371 = vmatpush.bf16.msra.mxu0 0
  %372 = vmatpush.bf16.msra.mxu0 0
  %373 = vmatpush.bf16.msra.mxu0 0
  %374 = vmatpush.bf16.msra.mxu0 %v362
  %375 = vmatpush.bf16.msra.mxu0 %v361
  %376 = vmatpush.bf16.msra.mxu0 %v360
  %377 = vmatpush.bf16.msra.mxu0 %v359
  %378 = vmatmul.bf16.gmra.mxu0 %v368
  %v379 = vpop.f32.mrf.mxu0
  %v380 = vadd.f32 %v337, %v379
  %v381 = vpop.f32.mrf.mxu0
  %382 = vdwg.mxu0
  %v383 = vadd.f32 %v380, %v177
  %v384 = vmul.f32 %v383, %v195
  %v385 = vtanh.pop %v384
  %v386 = vmul.f32 %v385, %v195
  %v387 = vadd.f32 %v386, %v196
  %v388 = vmul.f32 %v387, 0.0
  %390 = vrot.lane.b32.xlu0 %v387, 64
  %v391 = vpop.permute.xlu0 %390
  %v393 = vmul.f32 %v387, %v391
  %395 = vrot.lane.b32.xlu0 %v393, 32
  %v396 = vpop.permute.xlu0 %395
  %v398 = vadd.f32 %v388, %v396
  %v399 = vtanh.pop %v398
  %401 = vrot.lane.b32.xlu0 %v399, 64
  %v402 = vpop.permute.xlu0 %401
  %v404 = vmul.f32 %v387, %v402
  %s405 = smul.u32 1, 2
  %s406 = smul.addr %s405, 8
  %s407 = scalar_lea.vmem [#allocation2], %s406
  %v408 = vld [vmem:[%s407] sm:$0xff]
  %v409 = vld [vmem:[%s407 + $0x8] sm:$0xff]
  %410 = vmatpush.bf16.msra.mxu0 0
  %411 = vmatpush.bf16.msra.mxu0 0
  %412 = vmatpush.bf16.msra.mxu0 0
  %413 = vmatpush.bf16.msra.mxu0 0
  %414 = vmatpush.bf16.msra.mxu0 %v240
  %415 = vmatpush.bf16.msra.mxu0 %v238
  %416 = vmatpush.bf16.msra.mxu0 %v236
  %417 = vmatpush.bf16.msra.mxu0 %v234
  %418 = vmatmul.bf16.gmra.mxu0 %v368
  %v419 = vpop.f32.mrf.mxu0
  %v420 = vadd.f32 0.0, %v419
  %v421 = vpop.f32.mrf.mxu0
  %422 = vdwg.mxu0
  %423 = vmatpush.bf16.msra.mxu0 0
  %424 = vmatpush.bf16.msra.mxu0 0
  %425 = vmatpush.bf16.msra.mxu0 0
  %426 = vmatpush.bf16.msra.mxu0 0
  %427 = vmatpush.bf16.msra.mxu0 %v241
  %428 = vmatpush.bf16.msra.mxu0 %v239
  %429 = vmatpush.bf16.msra.mxu0 %v237
  %430 = vmatpush.bf16.msra.mxu0 %v235
  %431 = vmatmul.bf16.gmra.mxu0 %v368
  %v432 = vpop.f32.mrf.mxu0
  %v433 = vadd.f32 0.0, %v432
  %v434 = vpop.f32.mrf.mxu0
  %435 = vdwg.mxu0
  %v436 = vadd.f32 %v408, %v420
  %v437 = vadd.f32 %v409, %v433
  %v438 = vmul.f32 %v436, %v188
  %v439 = vmul.f32 %v437, %v189
  %v440 = vtanh.pop %v438
  %v441 = vtanh.pop %v439
  %v442 = vmul.f32 %v440, %v188
  %v443 = vmul.f32 %v441, %v189
  %v444 = vadd.f32 %v442, %v190
  %v445 = vadd.f32 %v443, %v191
  %v446 = vmul.f32 %v444, %v296
  %v447 = vmul.f32 %v444, %v445
  %449 = vrot.lane.b32.xlu0 %v447, 64
  %v450 = vpop.permute.xlu0 %449
  %v452 = vadd.f32 %v446, %v450
  %v453 = vtanh.pop %v452
  %v454 = vmul.f32 %v445, %v453
  %v455 = vpack.c.bf16 %v454, %v454
  %v456 = vpack.c.bf16 %v404, %v404
  %458 = vrot.lane.b32.xlu0 %v456, 32
  %v459 = vpop.permute.xlu0 %458
  %v461 = vsel %vm324, %v459, 0
  %463 = vmatpush.bf16.msra.mxu0 0
  %464 = vmatpush.bf16.msra.mxu0 0
  %465 = vmatpush.bf16.msra.mxu0 0
  %466 = vmatpush.bf16.msra.mxu0 0
  %467 = vmatpush.bf16.msra.mxu0 0
  %468 = vmatpush.bf16.msra.mxu0 0
  %469 = vmatpush.bf16.msra.mxu0 %v321
  %470 = vmatpush.bf16.msra.mxu0 %v320
  %471 = vmatmul.bf16.gmra.mxu0 %v461
  %v472 = vpop.f32.mrf.mxu0
  %v473 = vadd.f32 0.0, %v472
  %v474 = vpop.f32.mrf.mxu0
  %475 = vdwg.mxu0
  %477 = vrot.lane.b32.xlu0 %v455, 64
  %v478 = vpop.permute.xlu0 %477
  %v480 = vsel %vm250, %v478, 0
  %482 = vmatpush.bf16.msra.mxu0 0
  %483 = vmatpush.bf16.msra.mxu0 0
  %484 = vmatpush.bf16.msra.mxu0 0
  %485 = vmatpush.bf16.msra.mxu0 0
  %486 = vmatpush.bf16.msra.mxu0 %v362
  %487 = vmatpush.bf16.msra.mxu0 %v361
  %488 = vmatpush.bf16.msra.mxu0 %v360
  %489 = vmatpush.bf16.msra.mxu0 %v359
  %490 = vmatmul.bf16.gmra.mxu0 %v480
  %v491 = vpop.f32.mrf.mxu0
  %v492 = vadd.f32 %v473, %v491
  %v493 = vpop.f32.mrf.mxu0
  %494 = vdwg.mxu0
  %v495 = vadd.f32 %v492, %v177
  %v496 = vmul.f32 %v495, %v195
  %v497 = vtanh.pop %v496
  %v498 = vmul.f32 %v497, %v195
  %v499 = vadd.f32 %v498, %v196
  %v500 = vmul.f32 %v499, %v398
  %502 = vrot.lane.b32.xlu0 %v499, 64
  %v503 = vpop.permute.xlu0 %502
  %v505 = vmul.f32 %v499, %v503
  %507 = vrot.lane.b32.xlu0 %v505, 32
  %v508 = vpop.permute.xlu0 %507
  %v510 = vadd.f32 %v500, %v508
  %v511 = vtanh.pop %v510
  %513 = vrot.lane.b32.xlu0 %v511, 64
  %v514 = vpop.permute.xlu0 %513
  %v516 = vmul.f32 %v499, %v514
  %s517 = smul.u32 2, 2
  %s518 = smul.addr %s517, 8
  %s519 = scalar_lea.vmem [#allocation2], %s518
  %v520 = vld [vmem:[%s519] sm:$0xff]
  %v521 = vld [vmem:[%s519 + $0x8] sm:$0xff]
  %522 = vmatpush.bf16.msra.mxu0 0
  %523 = vmatpush.bf16.msra.mxu0 0
  %524 = vmatpush.bf16.msra.mxu0 0
  %525 = vmatpush.bf16.msra.mxu0 0
  %526 = vmatpush.bf16.msra.mxu0 %v240
  %527 = vmatpush.bf16.msra.mxu0 %v238
  %528 = vmatpush.bf16.msra.mxu0 %v236
  %529 = vmatpush.bf16.msra.mxu0 %v234
  %530 = vmatmul.bf16.gmra.mxu0 %v480
  %v531 = vpop.f32.mrf.mxu0
  %v532 = vadd.f32 0.0, %v531
  %v533 = vpop.f32.mrf.mxu0
  %534 = vdwg.mxu0
  %535 = vmatpush.bf16.msra.mxu0 0
  %536 = vmatpush.bf16.msra.mxu0 0
  %537 = vmatpush.bf16.msra.mxu0 0
  %538 = vmatpush.bf16.msra.mxu0 0
  %539 = vmatpush.bf16.msra.mxu0 %v241
  %540 = vmatpush.bf16.msra.mxu0 %v239
  %541 = vmatpush.bf16.msra.mxu0 %v237
  %542 = vmatpush.bf16.msra.mxu0 %v235
  %543 = vmatmul.bf16.gmra.mxu0 %v480
  %v544 = vpop.f32.mrf.mxu0
  %v545 = vadd.f32 0.0, %v544
  %v546 = vpop.f32.mrf.mxu0
  %547 = vdwg.mxu0
  %v548 = vadd.f32 %v520, %v532
  %v549 = vadd.f32 %v521, %v545
  %v550 = vmul.f32 %v548, %v188
  %v551 = vmul.f32 %v549, %v189
  %v552 = vtanh.pop %v550
  %v553 = vtanh.pop %v551
  %v554 = vmul.f32 %v552, %v188
  %v555 = vmul.f32 %v553, %v189
  %v556 = vadd.f32 %v554, %v190
  %v557 = vadd.f32 %v555, %v191
  %v558 = vmul.f32 %v556, %v452
  %v559 = vmul.f32 %v556, %v557
  %561 = vrot.lane.b32.xlu0 %v559, 64
  %v562 = vpop.permute.xlu0 %561
  %v564 = vadd.f32 %v558, %v562
  %v565 = vtanh.pop %v564
  %v566 = vmul.f32 %v557, %v565
  %v567 = vpack.c.bf16 %v566, %v566
  %v568 = vpack.c.bf16 %v516, %v516
  %570 = vrot.lane.b32.xlu0 %v568, 32
  %v571 = vpop.permute.xlu0 %570
  %v573 = vsel %vm324, %v571, 0
  %575 = vmatpush.bf16.msra.mxu0 0
  %576 = vmatpush.bf16.msra.mxu0 0
  %577 = vmatpush.bf16.msra.mxu0 0
  %578 = vmatpush.bf16.msra.mxu0 0
  %579 = vmatpush.bf16.msra.mxu0 0
  %580 = vmatpush.bf16.msra.mxu0 0
  %581 = vmatpush.bf16.msra.mxu0 %v321
  %582 = vmatpush.bf16.msra.mxu0 %v320
  %583 = vmatmul.bf16.gmra.mxu0 %v573
  %v584 = vpop.f32.mrf.mxu0
  %v585 = vadd.f32 0.0, %v584
  %v586 = vpop.f32.mrf.mxu0
  %587 = vdwg.mxu0
  %589 = vrot.lane.b32.xlu0 %v567, 64
  %v590 = vpop.permute.xlu0 %589
  %v592 = vsel %vm250, %v590, 0
  %594 = vmatpush.bf16.msra.mxu0 0
  %595 = vmatpush.bf16.msra.mxu0 0
  %596 = vmatpush.bf16.msra.mxu0 0
  %597 = vmatpush.bf16.msra.mxu0 0
  %598 = vmatpush.bf16.msra.mxu0 %v362
  %599 = vmatpush.bf16.msra.mxu0 %v361
  %600 = vmatpush.bf16.msra.mxu0 %v360
  %601 = vmatpush.bf16.msra.mxu0 %v359
  %602 = vmatmul.bf16.gmra.mxu0 %v592
  %v603 = vpop.f32.mrf.mxu0
  %v604 = vadd.f32 %v585, %v603
  %v605 = vpop.f32.mrf.mxu0
  %606 = vdwg.mxu0
  %v607 = vadd.f32 %v604, %v177
  %v608 = vmul.f32 %v607, %v195
  %v609 = vtanh.pop %v608
  %v610 = vmul.f32 %v609, %v195
  %v611 = vadd.f32 %v610, %v196
  %v612 = vmul.f32 %v611, %v510
  %614 = vrot.lane.b32.xlu0 %v611, 64
  %v615 = vpop.permute.xlu0 %614
  %v617 = vmul.f32 %v611, %v615
  %619 = vrot.lane.b32.xlu0 %v617, 32
  %v620 = vpop.permute.xlu0 %619
  %v622 = vadd.f32 %v612, %v620
  %v623 = vtanh.pop %v622
  %625 = vrot.lane.b32.xlu0 %v623, 64
  %v626 = vpop.permute.xlu0 %625
  %v628 = vmul.f32 %v611, %v626
  %s629 = smul.u32 3, 2
  %s630 = smul.addr %s629, 8
  %s631 = scalar_lea.vmem [#allocation2], %s630
  %v632 = vld [vmem:[%s631] sm:$0xff]
  %v633 = vld [vmem:[%s631 + $0x8] sm:$0xff]
  %634 = vmatpush.bf16.msra.mxu0 0
  %635 = vmatpush.bf16.msra.mxu0 0
  %636 = vmatpush.bf16.msra.mxu0 0
  %637 = vmatpush.bf16.msra.mxu0 0
  %638 = vmatpush.bf16.msra.mxu0 %v240
  %639 = vmatpush.bf16.msra.mxu0 %v238
  %640 = vmatpush.bf16.msra.mxu0 %v236
  %641 = vmatpush.bf16.msra.mxu0 %v234
  %642 = vmatmul.bf16.gmra.mxu0 %v592
  %v643 = vpop.f32.mrf.mxu0
  %v644 = vadd.f32 0.0, %v643
  %v645 = vpop.f32.mrf.mxu0
  %646 = vdwg.mxu0
  %647 = vmatpush.bf16.msra.mxu0 0
  %648 = vmatpush.bf16.msra.mxu0 0
  %649 = vmatpush.bf16.msra.mxu0 0
  %650 = vmatpush.bf16.msra.mxu0 0
  %651 = vmatpush.bf16.msra.mxu0 %v241
  %652 = vmatpush.bf16.msra.mxu0 %v239
  %653 = vmatpush.bf16.msra.mxu0 %v237
  %654 = vmatpush.bf16.msra.mxu0 %v235
  %655 = vmatmul.bf16.gmra.mxu0 %v592
  %v656 = vpop.f32.mrf.mxu0
  %v657 = vadd.f32 0.0, %v656
  %v658 = vpop.f32.mrf.mxu0
  %659 = vdwg.mxu0
  %v660 = vadd.f32 %v632, %v644
  %v661 = vadd.f32 %v633, %v657
  %v662 = vmul.f32 %v660, %v188
  %v663 = vmul.f32 %v661, %v189
  %v664 = vtanh.pop %v662
  %v665 = vtanh.pop %v663
  %v666 = vmul.f32 %v664, %v188
  %v667 = vmul.f32 %v665, %v189
  %v668 = vadd.f32 %v666, %v190
  %v669 = vadd.f32 %v667, %v191
  %v670 = vmul.f32 %v668, %v564
  %v671 = vmul.f32 %v668, %v669
  %673 = vrot.lane.b32.xlu0 %v671, 64
  %v674 = vpop.permute.xlu0 %673
  %v676 = vadd.f32 %v670, %v674
  %v677 = vtanh.pop %v676
  %v678 = vmul.f32 %v669, %v677
  %v679 = vpack.c.bf16 %v678, %v678
  %v680 = vpack.c.bf16 %v628, %v628
  %682 = vrot.lane.b32.xlu0 %v680, 32
  %v683 = vpop.permute.xlu0 %682
  %v685 = vsel %vm324, %v683, 0
  %687 = vmatpush.bf16.msra.mxu0 0
  %688 = vmatpush.bf16.msra.mxu0 0
  %689 = vmatpush.bf16.msra.mxu0 0
  %690 = vmatpush.bf16.msra.mxu0 0
  %691 = vmatpush.bf16.msra.mxu0 0
  %692 = vmatpush.bf16.msra.mxu0 0
  %693 = vmatpush.bf16.msra.mxu0 %v321
  %694 = vmatpush.bf16.msra.mxu0 %v320
  %695 = vmatmul.bf16.gmra.mxu0 %v685
  %v696 = vpop.f32.mrf.mxu0
  %v697 = vadd.f32 0.0, %v696
  %v698 = vpop.f32.mrf.mxu0
  %699 = vdwg.mxu0
  %701 = vrot.lane.b32.xlu0 %v679, 64
  %v702 = vpop.permute.xlu0 %701
  %v704 = vsel %vm250, %v702, 0
  %706 = vmatpush.bf16.msra.mxu0 0
  %707 = vmatpush.bf16.msra.mxu0 0
  %708 = vmatpush.bf16.msra.mxu0 0
  %709 = vmatpush.bf16.msra.mxu0 0
  %710 = vmatpush.bf16.msra.mxu0 %v362
  %711 = vmatpush.bf16.msra.mxu0 %v361
  %712 = vmatpush.bf16.msra.mxu0 %v360
  %713 = vmatpush.bf16.msra.mxu0 %v359
  %714 = vmatmul.bf16.gmra.mxu0 %v704
  %v715 = vpop.f32.mrf.mxu0
  %v716 = vadd.f32 %v697, %v715
  %v717 = vpop.f32.mrf.mxu0
  %718 = vdwg.mxu0
  %v719 = vadd.f32 %v716, %v177
  %v720 = vmul.f32 %v719, %v195
  %v721 = vtanh.pop %v720
  %v722 = vmul.f32 %v721, %v195
  %v723 = vadd.f32 %v722, %v196
  %v724 = vmul.f32 %v723, %v622
  %726 = vrot.lane.b32.xlu0 %v723, 64
  %v727 = vpop.permute.xlu0 %726
  %v729 = vmul.f32 %v723, %v727
  %731 = vrot.lane.b32.xlu0 %v729, 32
  %v732 = vpop.permute.xlu0 %731
  %v734 = vadd.f32 %v724, %v732
  %v735 = vtanh.pop %v734
  %737 = vrot.lane.b32.xlu0 %v735, 64
  %v738 = vpop.permute.xlu0 %737
  %v740 = vmul.f32 %v723, %v738
  %s741 = smul.u32 4, 2
  %s742 = smul.addr %s741, 8
  %s743 = scalar_lea.vmem [#allocation2], %s742
  %v744 = vld [vmem:[%s743] sm:$0xff]
  %v745 = vld [vmem:[%s743 + $0x8] sm:$0xff]
  %746 = vmatpush.bf16.msra.mxu0 0
  %747 = vmatpush.bf16.msra.mxu0 0
  %748 = vmatpush.bf16.msra.mxu0 0
  %749 = vmatpush.bf16.msra.mxu0 0
  %750 = vmatpush.bf16.msra.mxu0 %v240
  %751 = vmatpush.bf16.msra.mxu0 %v238
  %752 = vmatpush.bf16.msra.mxu0 %v236
  %753 = vmatpush.bf16.msra.mxu0 %v234
  %754 = vmatmul.bf16.gmra.mxu0 %v704
  %v755 = vpop.f32.mrf.mxu0
  %v756 = vadd.f32 0.0, %v755
  %v757 = vpop.f32.mrf.mxu0
  %758 = vdwg.mxu0
  %759 = vmatpush.bf16.msra.mxu0 0
  %760 = vmatpush.bf16.msra.mxu0 0
  %761 = vmatpush.bf16.msra.mxu0 0
  %762 = vmatpush.bf16.msra.mxu0 0
  %763 = vmatpush.bf16.msra.mxu0 %v241
  %764 = vmatpush.bf16.msra.mxu0 %v239
  %765 = vmatpush.bf16.msra.mxu0 %v237
  %766 = vmatpush.bf16.msra.mxu0 %v235
  %767 = vmatmul.bf16.gmra.mxu0 %v704
  %v768 = vpop.f32.mrf.mxu0
  %v769 = vadd.f32 0.0, %v768
  %v770 = vpop.f32.mrf.mxu0
  %771 = vdwg.mxu0
  %v772 = vadd.f32 %v744, %v756
  %v773 = vadd.f32 %v745, %v769
  %v774 = vmul.f32 %v772, %v188
  %v775 = vmul.f32 %v773, %v189
  %v776 = vtanh.pop %v774
  %v777 = vtanh.pop %v775
  %v778 = vmul.f32 %v776, %v188
  %v779 = vmul.f32 %v777, %v189
  %v780 = vadd.f32 %v778, %v190
  %v781 = vadd.f32 %v779, %v191
  %v782 = vmul.f32 %v780, %v676
  %v783 = vmul.f32 %v780, %v781
  %785 = vrot.lane.b32.xlu0 %v783, 64
  %v786 = vpop.permute.xlu0 %785
  %v788 = vadd.f32 %v782, %v786
  %v789 = vtanh.pop %v788
  %v790 = vmul.f32 %v781, %v789
  %v791 = vpack.c.bf16 %v790, %v790
  %v792 = vpack.c.bf16 %v740, %v740
  %794 = vrot.lane.b32.xlu0 %v792, 32
  %v795 = vpop.permute.xlu0 %794
  %v797 = vsel %vm324, %v795, 0
  %799 = vmatpush.bf16.msra.mxu0 0
  %800 = vmatpush.bf16.msra.mxu0 0
  %801 = vmatpush.bf16.msra.mxu0 0
  %802 = vmatpush.bf16.msra.mxu0 0
  %803 = vmatpush.bf16.msra.mxu0 0
  %804 = vmatpush.bf16.msra.mxu0 0
  %805 = vmatpush.bf16.msra.mxu0 %v321
  %806 = vmatpush.bf16.msra.mxu0 %v320
  %807 = vmatmul.bf16.gmra.mxu0 %v797
  %v808 = vpop.f32.mrf.mxu0
  %v809 = vadd.f32 0.0, %v808
  %v810 = vpop.f32.mrf.mxu0
  %811 = vdwg.mxu0
  %813 = vrot.lane.b32.xlu0 %v791, 64
  %v814 = vpop.permute.xlu0 %813
  %v816 = vsel %vm250, %v814, 0
  %818 = vmatpush.bf16.msra.mxu0 0
  %819 = vmatpush.bf16.msra.mxu0 0
  %820 = vmatpush.bf16.msra.mxu0 0
  %821 = vmatpush.bf16.msra.mxu0 0
  %822 = vmatpush.bf16.msra.mxu0 %v362
  %823 = vmatpush.bf16.msra.mxu0 %v361
  %824 = vmatpush.bf16.msra.mxu0 %v360
  %825 = vmatpush.bf16.msra.mxu0 %v359
  %826 = vmatmul.bf16.gmra.mxu0 %v816
  %v827 = vpop.f32.mrf.mxu0
  %v828 = vadd.f32 %v809, %v827
  %v829 = vpop.f32.mrf.mxu0
  %830 = vdwg.mxu0
  %v831 = vadd.f32 %v828, %v177
  %v832 = vmul.f32 %v831, %v195
  %v833 = vtanh.pop %v832
  %v834 = vmul.f32 %v833, %v195
  %v835 = vadd.f32 %v834, %v196
  %v836 = vmul.f32 %v835, %v734
  %838 = vrot.lane.b32.xlu0 %v835, 64
  %v839 = vpop.permute.xlu0 %838
  %v841 = vmul.f32 %v835, %v839
  %843 = vrot.lane.b32.xlu0 %v841, 32
  %v844 = vpop.permute.xlu0 %843
  %v846 = vadd.f32 %v836, %v844
  %v847 = vtanh.pop %v846
  %849 = vrot.lane.b32.xlu0 %v847, 64
  %v850 = vpop.permute.xlu0 %849
  %v852 = vmul.f32 %v835, %v850
  %s853 = smul.u32 5, 2
  %s854 = smul.addr %s853, 8
  %s855 = scalar_lea.vmem [#allocation2], %s854
  %v856 = vld [vmem:[%s855] sm:$0xff]
  %v857 = vld [vmem:[%s855 + $0x8] sm:$0xff]
  %858 = vmatpush.bf16.msra.mxu0 0
  %859 = vmatpush.bf16.msra.mxu0 0
  %860 = vmatpush.bf16.msra.mxu0 0
  %861 = vmatpush.bf16.msra.mxu0 0
  %862 = vmatpush.bf16.msra.mxu0 %v240
  %863 = vmatpush.bf16.msra.mxu0 %v238
  %864 = vmatpush.bf16.msra.mxu0 %v236
  %865 = vmatpush.bf16.msra.mxu0 %v234
  %866 = vmatmul.bf16.gmra.mxu0 %v816
  %v867 = vpop.f32.mrf.mxu0
  %v868 = vadd.f32 0.0, %v867
  %v869 = vpop.f32.mrf.mxu0
  %870 = vdwg.mxu0
  %871 = vmatpush.bf16.msra.mxu0 0
  %872 = vmatpush.bf16.msra.mxu0 0
  %873 = vmatpush.bf16.msra.mxu0 0
  %874 = vmatpush.bf16.msra.mxu0 0
  %875 = vmatpush.bf16.msra.mxu0 %v241
  %876 = vmatpush.bf16.msra.mxu0 %v239
  %877 = vmatpush.bf16.msra.mxu0 %v237
  %878 = vmatpush.bf16.msra.mxu0 %v235
  %879 = vmatmul.bf16.gmra.mxu0 %v816
  %v880 = vpop.f32.mrf.mxu0
  %v881 = vadd.f32 0.0, %v880
  %v882 = vpop.f32.mrf.mxu0
  %883 = vdwg.mxu0
  %v884 = vadd.f32 %v856, %v868
  %v885 = vadd.f32 %v857, %v881
  %v886 = vmul.f32 %v884, %v188
  %v887 = vmul.f32 %v885, %v189
  %v888 = vtanh.pop %v886
  %v889 = vtanh.pop %v887
  %v890 = vmul.f32 %v888, %v188
  %v891 = vmul.f32 %v889, %v189
  %v892 = vadd.f32 %v890, %v190
  %v893 = vadd.f32 %v891, %v191
  %v894 = vmul.f32 %v892, %v788
  %v895 = vmul.f32 %v892, %v893
  %897 = vrot.lane.b32.xlu0 %v895, 64
  %v898 = vpop.permute.xlu0 %897
  %v900 = vadd.f32 %v894, %v898
  %v901 = vtanh.pop %v900
  %v902 = vmul.f32 %v893, %v901
  %v903 = vpack.c.bf16 %v902, %v902
  %v904 = vpack.c.bf16 %v852, %v852
  %906 = vrot.lane.b32.xlu0 %v904, 32
  %v907 = vpop.permute.xlu0 %906
  %v909 = vsel %vm324, %v907, 0
  %911 = vmatpush.bf16.msra.mxu0 0
  %912 = vmatpush.bf16.msra.mxu0 0
  %913 = vmatpush.bf16.msra.mxu0 0
  %914 = vmatpush.bf16.msra.mxu0 0
  %915 = vmatpush.bf16.msra.mxu0 0
  %916 = vmatpush.bf16.msra.mxu0 0
  %917 = vmatpush.bf16.msra.mxu0 %v321
  %918 = vmatpush.bf16.msra.mxu0 %v320
  %919 = vmatmul.bf16.gmra.mxu0 %v909
  %v920 = vpop.f32.mrf.mxu0
  %v921 = vadd.f32 0.0, %v920
  %v922 = vpop.f32.mrf.mxu0
  %923 = vdwg.mxu0
  %925 = vrot.lane.b32.xlu0 %v903, 64
  %v926 = vpop.permute.xlu0 %925
  %v928 = vsel %vm250, %v926, 0
  %930 = vmatpush.bf16.msra.mxu0 0
  %931 = vmatpush.bf16.msra.mxu0 0
  %932 = vmatpush.bf16.msra.mxu0 0
  %933 = vmatpush.bf16.msra.mxu0 0
  %934 = vmatpush.bf16.msra.mxu0 %v362
  %935 = vmatpush.bf16.msra.mxu0 %v361
  %936 = vmatpush.bf16.msra.mxu0 %v360
  %937 = vmatpush.bf16.msra.mxu0 %v359
  %938 = vmatmul.bf16.gmra.mxu0 %v928
  %v939 = vpop.f32.mrf.mxu0
  %v940 = vadd.f32 %v921, %v939
  %v941 = vpop.f32.mrf.mxu0
  %942 = vdwg.mxu0
  %v943 = vadd.f32 %v940, %v177
  %v944 = vmul.f32 %v943, %v195
  %v945 = vtanh.pop %v944
  %v946 = vmul.f32 %v945, %v195
  %v947 = vadd.f32 %v946, %v196
  %v948 = vmul.f32 %v947, %v846
  %950 = vrot.lane.b32.xlu0 %v947, 64
  %v951 = vpop.permute.xlu0 %950
  %v953 = vmul.f32 %v947, %v951
  %955 = vrot.lane.b32.xlu0 %v953, 32
  %v956 = vpop.permute.xlu0 %955
  %v958 = vadd.f32 %v948, %v956
  %v959 = vtanh.pop %v958
  %961 = vrot.lane.b32.xlu0 %v959, 64
  %v962 = vpop.permute.xlu0 %961
  %v964 = vmul.f32 %v947, %v962
  %s965 = smul.u32 6, 2
  %s966 = smul.addr %s965, 8
  %s967 = scalar_lea.vmem [#allocation2], %s966
  %v968 = vld [vmem:[%s967] sm:$0xff]
  %v969 = vld [vmem:[%s967 + $0x8] sm:$0xff]
  %970 = vmatpush.bf16.msra.mxu0 0
  %971 = vmatpush.bf16.msra.mxu0 0
  %972 = vmatpush.bf16.msra.mxu0 0
  %973 = vmatpush.bf16.msra.mxu0 0
  %974 = vmatpush.bf16.msra.mxu0 %v240
  %975 = vmatpush.bf16.msra.mxu0 %v238
  %976 = vmatpush.bf16.msra.mxu0 %v236
  %977 = vmatpush.bf16.msra.mxu0 %v234
  %978 = vmatmul.bf16.gmra.mxu0 %v928
  %v979 = vpop.f32.mrf.mxu0
  %v980 = vadd.f32 0.0, %v979
  %v981 = vpop.f32.mrf.mxu0
  %982 = vdwg.mxu0
  %983 = vmatpush.bf16.msra.mxu0 0
  %984 = vmatpush.bf16.msra.mxu0 0
  %985 = vmatpush.bf16.msra.mxu0 0
  %986 = vmatpush.bf16.msra.mxu0 0
  %987 = vmatpush.bf16.msra.mxu0 %v241
  %988 = vmatpush.bf16.msra.mxu0 %v239
  %989 = vmatpush.bf16.msra.mxu0 %v237
  %990 = vmatpush.bf16.msra.mxu0 %v235
  %991 = vmatmul.bf16.gmra.mxu0 %v928
  %v992 = vpop.f32.mrf.mxu0
  %v993 = vadd.f32 0.0, %v992
  %v994 = vpop.f32.mrf.mxu0
  %995 = vdwg.mxu0
  %v996 = vadd.f32 %v968, %v980
  %v997 = vadd.f32 %v969, %v993
  %v998 = vmul.f32 %v996, %v188
  %v999 = vmul.f32 %v997, %v189
  %v1000 = vtanh.pop %v998
  %v1001 = vtanh.pop %v999
  %v1002 = vmul.f32 %v1000, %v188
  %v1003 = vmul.f32 %v1001, %v189
  %v1004 = vadd.f32 %v1002, %v190
  %v1005 = vadd.f32 %v1003, %v191
  %v1006 = vmul.f32 %v1004, %v900
  %v1007 = vmul.f32 %v1004, %v1005
  %1009 = vrot.lane.b32.xlu0 %v1007, 64
  %v1010 = vpop.permute.xlu0 %1009
  %v1012 = vadd.f32 %v1006, %v1010
  %v1013 = vtanh.pop %v1012
  %v1014 = vmul.f32 %v1005, %v1013
  %v1015 = vpack.c.bf16 %v1014, %v1014
  %v1016 = vpack.c.bf16 %v964, %v964
  %1018 = vrot.lane.b32.xlu0 %v1016, 32
  %v1019 = vpop.permute.xlu0 %1018
  %v1021 = vsel %vm324, %v1019, 0
  %1023 = vmatpush.bf16.msra.mxu0 0
  %1024 = vmatpush.bf16.msra.mxu0 0
  %1025 = vmatpush.bf16.msra.mxu0 0
  %1026 = vmatpush.bf16.msra.mxu0 0
  %1027 = vmatpush.bf16.msra.mxu0 0
  %1028 = vmatpush.bf16.msra.mxu0 0
  %1029 = vmatpush.bf16.msra.mxu0 %v321
  %1030 = vmatpush.bf16.msra.mxu0 %v320
  %1031 = vmatmul.bf16.gmra.mxu0 %v1021
  %v1032 = vpop.f32.mrf.mxu0
  %v1033 = vadd.f32 0.0, %v1032
  %v1034 = vpop.f32.mrf.mxu0
  %1035 = vdwg.mxu0
  %1037 = vrot.lane.b32.xlu0 %v1015, 64
  %v1038 = vpop.permute.xlu0 %1037
  %v1040 = vsel %vm250, %v1038, 0
  %1042 = vmatpush.bf16.msra.mxu0 0
  %1043 = vmatpush.bf16.msra.mxu0 0
  %1044 = vmatpush.bf16.msra.mxu0 0
  %1045 = vmatpush.bf16.msra.mxu0 0
  %1046 = vmatpush.bf16.msra.mxu0 %v362
  %1047 = vmatpush.bf16.msra.mxu0 %v361
  %1048 = vmatpush.bf16.msra.mxu0 %v360
  %1049 = vmatpush.bf16.msra.mxu0 %v359
  %1050 = vmatmul.bf16.gmra.mxu0 %v1040
  %v1051 = vpop.f32.mrf.mxu0
  %v1052 = vadd.f32 %v1033, %v1051
  %v1053 = vpop.f32.mrf.mxu0
  %1054 = vdwg.mxu0
  %v1055 = vadd.f32 %v1052, %v177
  %v1056 = vmul.f32 %v1055, %v195
  %v1057 = vtanh.pop %v1056
  %v1058 = vmul.f32 %v1057, %v195
  %v1059 = vadd.f32 %v1058, %v196
  %v1060 = vmul.f32 %v1059, %v958
  %1062 = vrot.lane.b32.xlu0 %v1059, 64
  %v1063 = vpop.permute.xlu0 %1062
  %v1065 = vmul.f32 %v1059, %v1063
  %1067 = vrot.lane.b32.xlu0 %v1065, 32
  %v1068 = vpop.permute.xlu0 %1067
  %v1070 = vadd.f32 %v1060, %v1068
  %v1071 = vtanh.pop %v1070
  %1073 = vrot.lane.b32.xlu0 %v1071, 64
  %v1074 = vpop.permute.xlu0 %1073
  %v1076 = vmul.f32 %v1059, %v1074
  %s1077 = smul.u32 7, 2
  %s1078 = smul.addr %s1077, 8
  %s1079 = scalar_lea.vmem [#allocation2], %s1078
  %v1080 = vld [vmem:[%s1079] sm:$0xff]
  %v1081 = vld [vmem:[%s1079 + $0x8] sm:$0xff]
  %1082 = vmatpush.bf16.msra.mxu0 0
  %1083 = vmatpush.bf16.msra.mxu0 0
  %1084 = vmatpush.bf16.msra.mxu0 0
  %1085 = vmatpush.bf16.msra.mxu0 0
  %1086 = vmatpush.bf16.msra.mxu0 %v240
  %1087 = vmatpush.bf16.msra.mxu0 %v238
  %1088 = vmatpush.bf16.msra.mxu0 %v236
  %1089 = vmatpush.bf16.msra.mxu0 %v234
  %1090 = vmatmul.bf16.gmra.mxu0 %v1040
  %v1091 = vpop.f32.mrf.mxu0
  %v1092 = vadd.f32 0.0, %v1091
  %v1093 = vpop.f32.mrf.mxu0
  %1094 = vdwg.mxu0
  %1095 = vmatpush.bf16.msra.mxu0 0
  %1096 = vmatpush.bf16.msra.mxu0 0
  %1097 = vmatpush.bf16.msra.mxu0 0
  %1098 = vmatpush.bf16.msra.mxu0 0
  %1099 = vmatpush.bf16.msra.mxu0 %v241
  %1100 = vmatpush.bf16.msra.mxu0 %v239
  %1101 = vmatpush.bf16.msra.mxu0 %v237
  %1102 = vmatpush.bf16.msra.mxu0 %v235
  %1103 = vmatmul.bf16.gmra.mxu0 %v1040
  %v1104 = vpop.f32.mrf.mxu0
  %v1105 = vadd.f32 0.0, %v1104
  %v1106 = vpop.f32.mrf.mxu0
  %1107 = vdwg.mxu0
  %v1108 = vadd.f32 %v1080, %v1092
  %v1109 = vadd.f32 %v1081, %v1105
  %v1110 = vmul.f32 %v1108, %v188
  %v1111 = vmul.f32 %v1109, %v189
  %v1112 = vtanh.pop %v1110
  %v1113 = vtanh.pop %v1111
  %v1114 = vmul.f32 %v1112, %v188
  %v1115 = vmul.f32 %v1113, %v189
  %v1116 = vadd.f32 %v1114, %v190
  %v1117 = vadd.f32 %v1115, %v191
  %v1118 = vmul.f32 %v1116, %v1012
  %v1119 = vmul.f32 %v1116, %v1117
  %1121 = vrot.lane.b32.xlu0 %v1119, 64
  %v1122 = vpop.permute.xlu0 %1121
  %v1124 = vadd.f32 %v1118, %v1122
  %v1125 = vtanh.pop %v1124
  %v1126 = vmul.f32 %v1117, %v1125
  %v1127 = vpack.c.bf16 %v1126, %v1126
  %v1128 = vpack.c.bf16 %v1076, %v1076
  %1130 = vrot.lane.b32.xlu0 %v1128, 32
  %v1131 = vpop.permute.xlu0 %1130
  %v1133 = vsel %vm324, %v1131, 0
  %1135 = vmatpush.bf16.msra.mxu0 0
  %1136 = vmatpush.bf16.msra.mxu0 0
  %1137 = vmatpush.bf16.msra.mxu0 0
  %1138 = vmatpush.bf16.msra.mxu0 0
  %1139 = vmatpush.bf16.msra.mxu0 0
  %1140 = vmatpush.bf16.msra.mxu0 0
  %1141 = vmatpush.bf16.msra.mxu0 %v321
  %1142 = vmatpush.bf16.msra.mxu0 %v320
  %1143 = vmatmul.bf16.gmra.mxu0 %v1133
  %v1144 = vpop.f32.mrf.mxu0
  %v1145 = vadd.f32 0.0, %v1144
  %v1146 = vpop.f32.mrf.mxu0
  %1147 = vdwg.mxu0
  %1149 = vrot.lane.b32.xlu0 %v1127, 64
  %v1150 = vpop.permute.xlu0 %1149
  %v1152 = vsel %vm250, %v1150, 0
  %1154 = vmatpush.bf16.msra.mxu0 0
  %1155 = vmatpush.bf16.msra.mxu0 0
  %1156 = vmatpush.bf16.msra.mxu0 0
  %1157 = vmatpush.bf16.msra.mxu0 0
  %1158 = vmatpush.bf16.msra.mxu0 %v362
  %1159 = vmatpush.bf16.msra.mxu0 %v361
  %1160 = vmatpush.bf16.msra.mxu0 %v360
  %1161 = vmatpush.bf16.msra.mxu0 %v359
  %1162 = vmatmul.bf16.gmra.mxu0 %v1152
  %v1163 = vpop.f32.mrf.mxu0
  %v1164 = vadd.f32 %v1145, %v1163
  %v1165 = vpop.f32.mrf.mxu0
  %1166 = vdwg.mxu0
  %v1167 = vadd.f32 %v1164, %v177
  %v1168 = vmul.f32 %v1167, %v195
  %v1169 = vtanh.pop %v1168
  %v1170 = vmul.f32 %v1169, %v195
  %v1171 = vadd.f32 %v1170, %v196
  %v1172 = vmul.f32 %v1171, %v1070
  %1174 = vrot.lane.b32.xlu0 %v1171, 64
  %v1175 = vpop.permute.xlu0 %1174
  %v1177 = vmul.f32 %v1171, %v1175
  %1179 = vrot.lane.b32.xlu0 %v1177, 32
  %v1180 = vpop.permute.xlu0 %1179
  %v1182 = vadd.f32 %v1172, %v1180
  %v1183 = vtanh.pop %v1182
  %1185 = vrot.lane.b32.xlu0 %v1183, 64
  %v1186 = vpop.permute.xlu0 %1185
  %v1188 = vmul.f32 %v1171, %v1186
  %v1189 = vld [vmem:[%s7] sm:$0xff]
  %v1190 = vld [vmem:[%s7 + $0x8] sm:$0xff]
  %v1191 = vld [vmem:[%s7 + $0x10] sm:$0xff]
  %v1192 = vld [vmem:[%s7 + $0x18] sm:$0xff]
  %v1193 = vld [vmem:[%s8] sm:$0x1]
  %v1195 = vperm.slane %v1193, 0
  %1198 = vrot.lane.b32.xlu0 %v1188, 32
  %v1199 = vpop.permute.xlu0 %1198
  %v1200 = vsel %vm324, %v1199, 0
  %1202 = vmatpush.msra.mxu0 0.0
  %1203 = vmatpush.msra.mxu0 0.0
  %1204 = vmatpush.msra.mxu0 0.0
  %1205 = vmatpush.msra.mxu0 0.0
  %1206 = vmatpush.msra.mxu0 0.0
  %1207 = vmatpush.msra.mxu0 0.0
  %1208 = vmatpush.msra.mxu0 0.0
  %1209 = vmatpush.msra.mxu0 0.0
  %1210 = vmatpush.msra.mxu0 0.0
  %1211 = vmatpush.msra.mxu0 0.0
  %1212 = vmatpush.msra.mxu0 0.0
  %1213 = vmatpush.msra.mxu0 0.0
  %1214 = vmatpush.msra.mxu0 %v1192
  %1215 = vmatpush.msra.mxu0 %v1191
  %1216 = vmatpush.msra.mxu0 %v1190
  %1217 = vmatpush.msra.mxu0 %v1189
  %1218 = vmatmul.f32.gmra.mxu0 %v1200
  %v1219 = vpop.f32.mrf.mxu0
  %v1220 = vadd.f32 %v1195, %v1219
  %1221 = vdwg.mxu0
  %v1222 = vmax.f32 %v1220, 0.0
  %v1223 = vld [vmem:[%s9] sm:$0xff]
  %v1224 = vld [vmem:[%s9 + $0x8] sm:$0xff]
  %v1225 = vld [vmem:[#allocation3] sm:$0x1]
  %v1227 = vperm.slane %v1225, 0
  %vm1229 = vcmask 130048
  %v1231 = vsel %vm1229, %v1222, 0
  %1233 = vmatpush.msra.mxu0 0.0
  %1234 = vmatpush.msra.mxu0 0.0
  %1235 = vmatpush.msra.mxu0 0.0
  %1236 = vmatpush.msra.mxu0 0.0
  %1237 = vmatpush.msra.mxu0 0.0
  %1238 = vmatpush.msra.mxu0 0.0
  %1239 = vmatpush.msra.mxu0 0.0
  %1240 = vmatpush.msra.mxu0 0.0
  %1241 = vmatpush.msra.mxu0 0.0
  %1242 = vmatpush.msra.mxu0 0.0
  %1243 = vmatpush.msra.mxu0 0.0
  %1244 = vmatpush.msra.mxu0 0.0
  %1245 = vmatpush.msra.mxu0 0.0
  %1246 = vmatpush.msra.mxu0 0.0
  %1247 = vmatpush.msra.mxu0 %v1224
  %1248 = vmatpush.msra.mxu0 %v1223
  %1249 = vmatmul.f32.gmra.mxu0 %v1231
  %v1250 = vpop.f32.mrf.mxu0
  %v1251 = vadd.f32 %v1227, %v1250
  %1252 = vdwg.mxu0
  %vm1253 = vcmask 7168
  %1254 = vst.msk [vmem:[%s11] sm:$0xff] %vm1253, %v1251
  // Predicated region
  $region46: #{lstm_model_forward.1} parent=0 // pred_check
    _
  $region47: #{lstm_model_forward.1} parent=0 // pred_check_branch
    %1256 = sbr.rel (0) target = $region49
  $region48: #{lstm_model_forward.1} parent=0 // pred_region
    _
  $region49: #{lstm_model_forward.1} parent=0 // pred_fallthru
    _
  // Predicated region
  $region50: #{lstm_model_forward.1} parent=0 // pred_check
    _
  $region51: #{lstm_model_forward.1} parent=0 // pred_check_branch
    %1258 = sbr.rel (0) target = $region53
  $region52: #{lstm_model_forward.1} parent=0 // pred_region
    _
  $region53: #{lstm_model_forward.1} parent=0 // pred_fallthru
    _

</llo_original>
